<compile_context>
chip_gen: v7x
topology: tpu7x:2x2x1
jax: 0.10.0
libtpu: 0.0.40
codegen_flags: <defaults>
</compile_context>

<pallas_src>
import functools

import jax
import jax.numpy as jnp
import numpy as np
from jax import lax
from jax.experimental import pallas as pl
from jax.experimental.pallas import tpu as pltpu


def _round_up(x, m):
    return (x + m - 1) // m * m


def _conv_act_kernel(x_ref, w_ref, b_ref, o_ref, patches_ref, *,
                     C_in_pad, KH, KW, W, S_pad, BB):
    """One block of BB images per grid step.

    x_ref:       (BB, C_in_pad, Sin)       flat, channel- and tail-zero-padded images
    w_ref:       (C_out, KH*KW*C_in_pad)   weight taps, order (kh, kw, ic)
    b_ref:       (C_out, 1)
    o_ref:       (BB, C_out, S_pad)        lane-dense output slabs (S_pad % 128 == 0)
    patches_ref: (KH*KW*C_in_pad, BB*S_pad)  im2col scratch (every row/col is written)
    """
    # im2col: each (kh, kw) tap of image b is a lane-shifted slice of the flat
    # image.  All offsets are static; stores are 8-sublane / 128-lane aligned
    # full-vreg writes (t*C_in_pad multiple of 8, b*S_pad multiple of 128).
    for b in range(BB):
        for kh in range(KH):
            for kw in range(KW):
                t = kh * KW + kw
                shift = kh * W + kw
                patches_ref[pl.ds(t * C_in_pad, C_in_pad),
                            pl.ds(b * S_pad, S_pad)] = x_ref[b, :, pl.ds(shift, S_pad)]

    # Single MXU matmul over all taps and all BB images; f32 accumulation.
    val = jnp.dot(
        w_ref[...],
        patches_ref[...],
        preferred_element_type=jnp.float32,
        precision=lax.Precision.HIGHEST,
    )                                                   # (C_out, BB*S_pad)
    val = val + b_ref[...]

    # hardswish then relu:  max(v, 0) * min(v + 3, 6) / 6
    act = jnp.maximum(val, 0.0) * jnp.minimum(val + 3.0, 6.0) * jnp.float32(1.0 / 6.0)

    # Per-image lane-dense stores (offsets are multiples of 128 lanes).
    for b in range(BB):
        o_ref[b] = act[:, b * S_pad:(b + 1) * S_pad].astype(o_ref.dtype)


def fused_conv_activation(x, weight, bias, *, max_bb=32, vmem_budget=20 * (1 << 20)):
    """x: (B, C_in, H, W), weight: (C_out, C_in, KH, KW), bias: (C_out,) -> (B, C_out, OH, OW)."""
    B, C_in, H, W = x.shape
    C_out, _, KH, KW = weight.shape
    OH, OW = H - KH + 1, W - KW + 1

    C_in_pad = _round_up(C_in, 8)            # 8-sublane aligned tap blocks
    S = OH * W                               # valid flat-output columns per image
    S_pad = _round_up(S, 128)                # lane-dense slab width (multiple of 128)
    Sin = S_pad + (KH - 1) * W + (KW - 1)    # flat input length so every tap read is in-bounds
    CKK = KH * KW * C_in_pad

    # Per-image VMEM footprint (bytes): patches + double-buffered input + output.
    per_image = (CKK * S_pad + 2 * C_in_pad * Sin + 2 * C_out * S_pad) * 4

    # Largest divisor of B that fits the budget (caps grid-step overhead; keeps
    # multiple grid steps for large B so v7x's two TensorCores both get work).
    bb = 1
    for cand in range(1, min(B, max_bb) + 1):
        if B % cand == 0 and cand * per_image <= vmem_budget:
            bb = cand
    n_steps = B // bb

    # Layout plumbing in the wrapper (cheap XLA ops): flatten spatial, zero-pad
    # channels -> C_in_pad and tail -> Sin; flatten weight taps (kh, kw, ic)
    # with zero rows for the padded channels; bias as (C_out, 1).
    x_flat = jnp.pad(
        x.astype(jnp.float32).reshape(B, C_in, H * W),
        ((0, 0), (0, C_in_pad - C_in), (0, Sin - H * W)),
    )
    w2 = jnp.pad(
        jnp.transpose(weight.astype(jnp.float32), (0, 2, 3, 1)),
        ((0, 0), (0, 0), (0, 0), (0, C_in_pad - C_in)),
    ).reshape(C_out, CKK)
    b2 = bias.astype(jnp.float32).reshape(C_out, 1)

    kernel = functools.partial(
        _conv_act_kernel, C_in_pad=C_in_pad, KH=KH, KW=KW, W=W, S_pad=S_pad, BB=bb)

    vmem_limit = int(min(max(bb * per_image * 1.25 + (2 << 20), 16 * (1 << 20)),
                         60 * (1 << 20)))

    out_flat = pl.pallas_call(
        kernel,
        out_shape=jax.ShapeDtypeStruct((B, C_out, S_pad), jnp.float32),
        grid_spec=pltpu.PrefetchScalarGridSpec(
            num_scalar_prefetch=0,
            grid=(n_steps,),
            in_specs=[
                pl.BlockSpec((bb, C_in_pad, Sin), lambda s: (s, 0, 0)),
                pl.BlockSpec((C_out, CKK), lambda s: (0, 0)),   # resident weight
                pl.BlockSpec((C_out, 1), lambda s: (0, 0)),     # resident bias
            ],
            out_specs=pl.BlockSpec((bb, C_out, S_pad), lambda s: (s, 0, 0)),
            scratch_shapes=[pltpu.VMEM((CKK, bb * S_pad), jnp.float32)],
        ),
        compiler_params=pltpu.CompilerParams(
            dimension_semantics=("parallel",),
            vmem_limit_bytes=vmem_limit,
        ),
    )(x_flat, w2, b2)

    # (B, C_out, S_pad) -> drop lane pad -> (B, C_out, OH, W) -> drop width tail.
    out = out_flat[:, :, :S].reshape(B, C_out, OH, W)[..., :OW]
    return out.astype(x.dtype)


def _reference(x, weight, bias):
    val = lax.conv_general_dilated(
        x, weight, window_strides=(1, 1), padding="VALID",
        dimension_numbers=("NCHW", "OIHW", "NCHW"),
        precision=lax.Precision.HIGHEST,
    ) + bias.reshape(1, -1, 1, 1)
    return jnp.maximum(val, 0.0) * jnp.minimum(val + 3.0, 6.0) / 6.0


if __name__ == "__main__":
    # Small shapes consistent with the module: Conv2d(3, 16, kernel_size=3)
    B, C_in, C_out, H, W, K = 2, 3, 16, 16, 16, 3

    key = jax.random.PRNGKey(0)
    kx, kw, kb = jax.random.split(key, 3)

    x = jax.random.normal(kx, (B, C_in, H, W), dtype=jnp.float32)
    # Deterministic Conv2d-style init: uniform(-1/sqrt(fan_in), 1/sqrt(fan_in))
    fan_in = C_in * K * K
    bound = 1.0 / np.sqrt(fan_in)
    weight = jax.random.uniform(kw, (C_out, C_in, K, K), jnp.float32, -bound, bound)
    bias = jax.random.uniform(kb, (C_out,), jnp.float32, -bound, bound)

    out = fused_conv_activation(x, weight, bias)
    out = jax.block_until_ready(out)

    ref = jax.block_until_ready(_reference(x, weight, bias))
    assert out.shape == (B, C_out, H - K + 1, W - K + 1)
    np.testing.assert_allclose(np.asarray(out), np.asarray(ref), rtol=1e-4, atol=1e-5)

    print("KERNEL_OK")
</pallas_src>

<mosaic_0001>
module attributes {stable_mosaic.version = 11 : i64} {
  func.func @_conv_act_kernel(%arg0: i32, %arg1: memref<2x8x290xf32, #tpu.memory_space<vmem>>, %arg2: memref<16x72xf32, #tpu.memory_space<vmem>>, %arg3: memref<16x1xf32, #tpu.memory_space<vmem>>, %arg4: memref<2x16x256xf32, #tpu.memory_space<vmem>>, %arg5: memref<72x512xf32, #tpu.memory_space<vmem>>) attributes {dimension_semantics = [#tpu.dimension_semantics<parallel>], iteration_bounds = array<i64: 1>, scalar_prefetch = 0 : i64, scratch_operands = 1 : i64, tpu.core_type = #tpu.core_type<tc>, window_params = [{transform_indices = @transform_0, window_bounds = array<i64: 2, 8, 290>}, {pipeline_mode = #tpu.pipeline_mode<synchronous>, transform_indices = @transform_1, window_bounds = array<i64: 16, 72>}, {pipeline_mode = #tpu.pipeline_mode<synchronous>, transform_indices = @transform_2, window_bounds = array<i64: 16, 1>}, {transform_indices = @transform_3, window_bounds = array<i64: 2, 16, 256>}]} {
    %c0 = arith.constant 0 : index
    %c0_0 = arith.constant 0 : index
    %c0_1 = arith.constant 0 : index
    %0 = vector.load %arg1[%c0, %c0_0, %c0_1] : memref<2x8x290xf32, #tpu.memory_space<vmem>>, vector<1x8x256xf32>
    %1 = vector.shape_cast %0 : vector<1x8x256xf32> to vector<8x256xf32>
    %c0_2 = arith.constant 0 : index
    %c0_3 = arith.constant 0 : index
    %2 = vector.load %arg5[%c0_2, %c0_3] : memref<72x512xf32, #tpu.memory_space<vmem>>, vector<8x256xf32>
    tpu.vector_store %arg5[%c0_2, %c0_3], %1 {strides = array<i32>} : memref<72x512xf32, #tpu.memory_space<vmem>>, vector<8x256xf32>,
    %c0_4 = arith.constant 0 : index
    %c0_5 = arith.constant 0 : index
    %c1 = arith.constant 1 : index
    %3 = vector.load %arg1[%c0_4, %c0_5, %c1] : memref<2x8x290xf32, #tpu.memory_space<vmem>>, vector<1x8x256xf32>
    %4 = vector.shape_cast %3 : vector<1x8x256xf32> to vector<8x256xf32>
    %c8 = arith.constant 8 : index
    %c0_6 = arith.constant 0 : index
    %5 = vector.load %arg5[%c8, %c0_6] : memref<72x512xf32, #tpu.memory_space<vmem>>, vector<8x256xf32>
    tpu.vector_store %arg5[%c8, %c0_6], %4 {strides = array<i32>} : memref<72x512xf32, #tpu.memory_space<vmem>>, vector<8x256xf32>,
    %c0_7 = arith.constant 0 : index
    %c0_8 = arith.constant 0 : index
    %c2 = arith.constant 2 : index
    %6 = vector.load %arg1[%c0_7, %c0_8, %c2] : memref<2x8x290xf32, #tpu.memory_space<vmem>>, vector<1x8x256xf32>
    %7 = vector.shape_cast %6 : vector<1x8x256xf32> to vector<8x256xf32>
    %c16 = arith.constant 16 : index
    %c0_9 = arith.constant 0 : index
    %8 = vector.load %arg5[%c16, %c0_9] : memref<72x512xf32, #tpu.memory_space<vmem>>, vector<8x256xf32>
    tpu.vector_store %arg5[%c16, %c0_9], %7 {strides = array<i32>} : memref<72x512xf32, #tpu.memory_space<vmem>>, vector<8x256xf32>,
    %c0_10 = arith.constant 0 : index
    %c0_11 = arith.constant 0 : index
    %c16_12 = arith.constant 16 : index
    %9 = vector.load %arg1[%c0_10, %c0_11, %c16_12] : memref<2x8x290xf32, #tpu.memory_space<vmem>>, vector<1x8x256xf32>
    %10 = vector.shape_cast %9 : vector<1x8x256xf32> to vector<8x256xf32>
    %c24 = arith.constant 24 : index
    %c0_13 = arith.constant 0 : index
    %11 = vector.load %arg5[%c24, %c0_13] : memref<72x512xf32, #tpu.memory_space<vmem>>, vector<8x256xf32>
    tpu.vector_store %arg5[%c24, %c0_13], %10 {strides = array<i32>} : memref<72x512xf32, #tpu.memory_space<vmem>>, vector<8x256xf32>,
    %c0_14 = arith.constant 0 : index
    %c0_15 = arith.constant 0 : index
    %c17 = arith.constant 17 : index
    %12 = vector.load %arg1[%c0_14, %c0_15, %c17] : memref<2x8x290xf32, #tpu.memory_space<vmem>>, vector<1x8x256xf32>
    %13 = vector.shape_cast %12 : vector<1x8x256xf32> to vector<8x256xf32>
    %c32 = arith.constant 32 : index
    %c0_16 = arith.constant 0 : index
    %14 = vector.load %arg5[%c32, %c0_16] : memref<72x512xf32, #tpu.memory_space<vmem>>, vector<8x256xf32>
    tpu.vector_store %arg5[%c32, %c0_16], %13 {strides = array<i32>} : memref<72x512xf32, #tpu.memory_space<vmem>>, vector<8x256xf32>,
    %c0_17 = arith.constant 0 : index
    %c0_18 = arith.constant 0 : index
    %c18 = arith.constant 18 : index
    %15 = vector.load %arg1[%c0_17, %c0_18, %c18] : memref<2x8x290xf32, #tpu.memory_space<vmem>>, vector<1x8x256xf32>
    %16 = vector.shape_cast %15 : vector<1x8x256xf32> to vector<8x256xf32>
    %c40 = arith.constant 40 : index
    %c0_19 = arith.constant 0 : index
    %17 = vector.load %arg5[%c40, %c0_19] : memref<72x512xf32, #tpu.memory_space<vmem>>, vector<8x256xf32>
    tpu.vector_store %arg5[%c40, %c0_19], %16 {strides = array<i32>} : memref<72x512xf32, #tpu.memory_space<vmem>>, vector<8x256xf32>,
    %c0_20 = arith.constant 0 : index
    %c0_21 = arith.constant 0 : index
    %c32_22 = arith.constant 32 : index
    %18 = vector.load %arg1[%c0_20, %c0_21, %c32_22] : memref<2x8x290xf32, #tpu.memory_space<vmem>>, vector<1x8x256xf32>
    %19 = vector.shape_cast %18 : vector<1x8x256xf32> to vector<8x256xf32>
    %c48 = arith.constant 48 : index
    %c0_23 = arith.constant 0 : index
    %20 = vector.load %arg5[%c48, %c0_23] : memref<72x512xf32, #tpu.memory_space<vmem>>, vector<8x256xf32>
    tpu.vector_store %arg5[%c48, %c0_23], %19 {strides = array<i32>} : memref<72x512xf32, #tpu.memory_space<vmem>>, vector<8x256xf32>,
    %c0_24 = arith.constant 0 : index
    %c0_25 = arith.constant 0 : index
    %c33 = arith.constant 33 : index
    %21 = vector.load %arg1[%c0_24, %c0_25, %c33] : memref<2x8x290xf32, #tpu.memory_space<vmem>>, vector<1x8x256xf32>
    %22 = vector.shape_cast %21 : vector<1x8x256xf32> to vector<8x256xf32>
    %c56 = arith.constant 56 : index
    %c0_26 = arith.constant 0 : index
    %23 = vector.load %arg5[%c56, %c0_26] : memref<72x512xf32, #tpu.memory_space<vmem>>, vector<8x256xf32>
    tpu.vector_store %arg5[%c56, %c0_26], %22 {strides = array<i32>} : memref<72x512xf32, #tpu.memory_space<vmem>>, vector<8x256xf32>,
    %c0_27 = arith.constant 0 : index
    %c0_28 = arith.constant 0 : index
    %c34 = arith.constant 34 : index
    %24 = vector.load %arg1[%c0_27, %c0_28, %c34] : memref<2x8x290xf32, #tpu.memory_space<vmem>>, vector<1x8x256xf32>
    %25 = vector.shape_cast %24 : vector<1x8x256xf32> to vector<8x256xf32>
    %c64 = arith.constant 64 : index
    %c0_29 = arith.constant 0 : index
    %26 = vector.load %arg5[%c64, %c0_29] : memref<72x512xf32, #tpu.memory_space<vmem>>, vector<8x256xf32>
    tpu.vector_store %arg5[%c64, %c0_29], %25 {strides = array<i32>} : memref<72x512xf32, #tpu.memory_space<vmem>>, vector<8x256xf32>,
    %c1_30 = arith.constant 1 : index
    %c0_31 = arith.constant 0 : index
    %c0_32 = arith.constant 0 : index
    %27 = vector.load %arg1[%c1_30, %c0_31, %c0_32] : memref<2x8x290xf32, #tpu.memory_space<vmem>>, vector<1x8x256xf32>
    %28 = vector.shape_cast %27 : vector<1x8x256xf32> to vector<8x256xf32>
    %c0_33 = arith.constant 0 : index
    %c256 = arith.constant 256 : index
    %29 = vector.load %arg5[%c0_33, %c256] : memref<72x512xf32, #tpu.memory_space<vmem>>, vector<8x256xf32>
    tpu.vector_store %arg5[%c0_33, %c256], %28 {strides = array<i32>} : memref<72x512xf32, #tpu.memory_space<vmem>>, vector<8x256xf32>,
    %c1_34 = arith.constant 1 : index
    %c0_35 = arith.constant 0 : index
    %c1_36 = arith.constant 1 : index
    %30 = vector.load %arg1[%c1_34, %c0_35, %c1_36] : memref<2x8x290xf32, #tpu.memory_space<vmem>>, vector<1x8x256xf32>
    %31 = vector.shape_cast %30 : vector<1x8x256xf32> to vector<8x256xf32>
    %c8_37 = arith.constant 8 : index
    %c256_38 = arith.constant 256 : index
    %32 = vector.load %arg5[%c8_37, %c256_38] : memref<72x512xf32, #tpu.memory_space<vmem>>, vector<8x256xf32>
    tpu.vector_store %arg5[%c8_37, %c256_38], %31 {strides = array<i32>} : memref<72x512xf32, #tpu.memory_space<vmem>>, vector<8x256xf32>,
    %c1_39 = arith.constant 1 : index
    %c0_40 = arith.constant 0 : index
    %c2_41 = arith.constant 2 : index
    %33 = vector.load %arg1[%c1_39, %c0_40, %c2_41] : memref<2x8x290xf32, #tpu.memory_space<vmem>>, vector<1x8x256xf32>
    %34 = vector.shape_cast %33 : vector<1x8x256xf32> to vector<8x256xf32>
    %c16_42 = arith.constant 16 : index
    %c256_43 = arith.constant 256 : index
    %35 = vector.load %arg5[%c16_42, %c256_43] : memref<72x512xf32, #tpu.memory_space<vmem>>, vector<8x256xf32>
    tpu.vector_store %arg5[%c16_42, %c256_43], %34 {strides = array<i32>} : memref<72x512xf32, #tpu.memory_space<vmem>>, vector<8x256xf32>,
    %c1_44 = arith.constant 1 : index
    %c0_45 = arith.constant 0 : index
    %c16_46 = arith.constant 16 : index
    %36 = vector.load %arg1[%c1_44, %c0_45, %c16_46] : memref<2x8x290xf32, #tpu.memory_space<vmem>>, vector<1x8x256xf32>
    %37 = vector.shape_cast %36 : vector<1x8x256xf32> to vector<8x256xf32>
    %c24_47 = arith.constant 24 : index
    %c256_48 = arith.constant 256 : index
    %38 = vector.load %arg5[%c24_47, %c256_48] : memref<72x512xf32, #tpu.memory_space<vmem>>, vector<8x256xf32>
    tpu.vector_store %arg5[%c24_47, %c256_48], %37 {strides = array<i32>} : memref<72x512xf32, #tpu.memory_space<vmem>>, vector<8x256xf32>,
    %c1_49 = arith.constant 1 : index
    %c0_50 = arith.constant 0 : index
    %c17_51 = arith.constant 17 : index
    %39 = vector.load %arg1[%c1_49, %c0_50, %c17_51] : memref<2x8x290xf32, #tpu.memory_space<vmem>>, vector<1x8x256xf32>
    %40 = vector.shape_cast %39 : vector<1x8x256xf32> to vector<8x256xf32>
    %c32_52 = arith.constant 32 : index
    %c256_53 = arith.constant 256 : index
    %41 = vector.load %arg5[%c32_52, %c256_53] : memref<72x512xf32, #tpu.memory_space<vmem>>, vector<8x256xf32>
    tpu.vector_store %arg5[%c32_52, %c256_53], %40 {strides = array<i32>} : memref<72x512xf32, #tpu.memory_space<vmem>>, vector<8x256xf32>,
    %c1_54 = arith.constant 1 : index
    %c0_55 = arith.constant 0 : index
    %c18_56 = arith.constant 18 : index
    %42 = vector.load %arg1[%c1_54, %c0_55, %c18_56] : memref<2x8x290xf32, #tpu.memory_space<vmem>>, vector<1x8x256xf32>
    %43 = vector.shape_cast %42 : vector<1x8x256xf32> to vector<8x256xf32>
    %c40_57 = arith.constant 40 : index
    %c256_58 = arith.constant 256 : index
    %44 = vector.load %arg5[%c40_57, %c256_58] : memref<72x512xf32, #tpu.memory_space<vmem>>, vector<8x256xf32>
    tpu.vector_store %arg5[%c40_57, %c256_58], %43 {strides = array<i32>} : memref<72x512xf32, #tpu.memory_space<vmem>>, vector<8x256xf32>,
    %c1_59 = arith.constant 1 : index
    %c0_60 = arith.constant 0 : index
    %c32_61 = arith.constant 32 : index
    %45 = vector.load %arg1[%c1_59, %c0_60, %c32_61] : memref<2x8x290xf32, #tpu.memory_space<vmem>>, vector<1x8x256xf32>
    %46 = vector.shape_cast %45 : vector<1x8x256xf32> to vector<8x256xf32>
    %c48_62 = arith.constant 48 : index
    %c256_63 = arith.constant 256 : index
    %47 = vector.load %arg5[%c48_62, %c256_63] : memref<72x512xf32, #tpu.memory_space<vmem>>, vector<8x256xf32>
    tpu.vector_store %arg5[%c48_62, %c256_63], %46 {strides = array<i32>} : memref<72x512xf32, #tpu.memory_space<vmem>>, vector<8x256xf32>,
    %c1_64 = arith.constant 1 : index
    %c0_65 = arith.constant 0 : index
    %c33_66 = arith.constant 33 : index
    %48 = vector.load %arg1[%c1_64, %c0_65, %c33_66] : memref<2x8x290xf32, #tpu.memory_space<vmem>>, vector<1x8x256xf32>
    %49 = vector.shape_cast %48 : vector<1x8x256xf32> to vector<8x256xf32>
    %c56_67 = arith.constant 56 : index
    %c256_68 = arith.constant 256 : index
    %50 = vector.load %arg5[%c56_67, %c256_68] : memref<72x512xf32, #tpu.memory_space<vmem>>, vector<8x256xf32>
    tpu.vector_store %arg5[%c56_67, %c256_68], %49 {strides = array<i32>} : memref<72x512xf32, #tpu.memory_space<vmem>>, vector<8x256xf32>,
    %c1_69 = arith.constant 1 : index
    %c0_70 = arith.constant 0 : index
    %c34_71 = arith.constant 34 : index
    %51 = vector.load %arg1[%c1_69, %c0_70, %c34_71] : memref<2x8x290xf32, #tpu.memory_space<vmem>>, vector<1x8x256xf32>
    %52 = vector.shape_cast %51 : vector<1x8x256xf32> to vector<8x256xf32>
    %c64_72 = arith.constant 64 : index
    %c256_73 = arith.constant 256 : index
    %53 = vector.load %arg5[%c64_72, %c256_73] : memref<72x512xf32, #tpu.memory_space<vmem>>, vector<8x256xf32>
    tpu.vector_store %arg5[%c64_72, %c256_73], %52 {strides = array<i32>} : memref<72x512xf32, #tpu.memory_space<vmem>>, vector<8x256xf32>,
    %c0_74 = arith.constant 0 : index
    %c0_75 = arith.constant 0 : index
    %54 = vector.load %arg2[%c0_74, %c0_75] : memref<16x72xf32, #tpu.memory_space<vmem>>, vector<16x72xf32>
    %c0_76 = arith.constant 0 : index
    %c0_77 = arith.constant 0 : index
    %55 = vector.load %arg5[%c0_76, %c0_77] : memref<72x512xf32, #tpu.memory_space<vmem>>, vector<72x512xf32>
    %cst = arith.constant dense<0.000000e+00> : vector<16x512xf32>
    %56 = tpu.matmul %54, %55, %cst {dimension_numbers = #tpu.dot_dimension_numbers<[1], [0], [0], [1], [0, 0, 1, 1], [], []>, precision = #tpu.contract_precision<fp32>} : vector<16x72xf32>, vector<72x512xf32>, vector<16x512xf32> -> vector<16x512xf32>
    %c0_78 = arith.constant 0 : index
    %c0_79 = arith.constant 0 : index
    %57 = vector.load %arg3[%c0_78, %c0_79] : memref<16x1xf32, #tpu.memory_space<vmem>>, vector<16x1xf32>
    %58 = vector.broadcast %57 : vector<16x1xf32> to vector<16x512xf32>
    %59 = arith.addf %56, %58 : vector<16x512xf32>
    %cst_80 = arith.constant 0.000000e+00 : f32
    %60 = vector.broadcast %cst_80 : f32 to vector<16x512xf32>
    %61 = arith.maximumf %59, %60 : vector<16x512xf32>
    %cst_81 = arith.constant 3.000000e+00 : f32
    %62 = vector.broadcast %cst_81 : f32 to vector<16x512xf32>
    %63 = arith.addf %59, %62 : vector<16x512xf32>
    %cst_82 = arith.constant 6.000000e+00 : f32
    %64 = vector.broadcast %cst_82 : f32 to vector<16x512xf32>
    %65 = arith.minimumf %63, %64 : vector<16x512xf32>
    %66 = arith.mulf %61, %65 : vector<16x512xf32>
    %cst_83 = arith.constant 0.166666672 : f32
    %67 = vector.broadcast %cst_83 : f32 to vector<16x512xf32>
    %68 = arith.mulf %66, %67 : vector<16x512xf32>
    %69 = vector.extract_strided_slice %68 {offsets = [0, 0], sizes = [16, 256], strides = [1, 1]} : vector<16x512xf32> to vector<16x256xf32>
    %c0_84 = arith.constant 0 : index
    %c0_85 = arith.constant 0 : index
    %c0_86 = arith.constant 0 : index
    %70 = vector.load %arg4[%c0_84, %c0_85, %c0_86] : memref<2x16x256xf32, #tpu.memory_space<vmem>>, vector<1x16x256xf32>
    %71 = vector.shape_cast %70 : vector<1x16x256xf32> to vector<16x256xf32>
    %72 = vector.shape_cast %69 : vector<16x256xf32> to vector<1x16x256xf32>
    tpu.vector_store %arg4[%c0_84, %c0_85, %c0_86], %72 {strides = array<i32>} : memref<2x16x256xf32, #tpu.memory_space<vmem>>, vector<1x16x256xf32>,
    %73 = vector.extract_strided_slice %68 {offsets = [0, 256], sizes = [16, 256], strides = [1, 1]} : vector<16x512xf32> to vector<16x256xf32>
    %c1_87 = arith.constant 1 : index
    %c0_88 = arith.constant 0 : index
    %c0_89 = arith.constant 0 : index
    %74 = vector.load %arg4[%c1_87, %c0_88, %c0_89] : memref<2x16x256xf32, #tpu.memory_space<vmem>>, vector<1x16x256xf32>
    %75 = vector.shape_cast %74 : vector<1x16x256xf32> to vector<16x256xf32>
    %76 = vector.shape_cast %73 : vector<16x256xf32> to vector<1x16x256xf32>
    tpu.vector_store %arg4[%c1_87, %c0_88, %c0_89], %76 {strides = array<i32>} : memref<2x16x256xf32, #tpu.memory_space<vmem>>, vector<1x16x256xf32>,
    return
  }
  func.func @transform_0(%arg0: i32) -> (i32, i32, i32) {
    %c0_i32 = arith.constant 0 : i32
    %c0_i32_0 = arith.constant 0 : i32
    %c0_i32_1 = arith.constant 0 : i32
    return %arg0, %c0_i32, %c0_i32_0 : i32, i32, i32
  }
  func.func @transform_1(%arg0: i32) -> (i32, i32) {
    %c0_i32 = arith.constant 0 : i32
    %c0_i32_0 = arith.constant 0 : i32
    %c0_i32_1 = arith.constant 0 : i32
    return %c0_i32, %c0_i32_0 : i32, i32
  }
  func.func @transform_2(%arg0: i32) -> (i32, i32) {
    %c0_i32 = arith.constant 0 : i32
    %c0_i32_0 = arith.constant 0 : i32
    %c0_i32_1 = arith.constant 0 : i32
    return %c0_i32, %c0_i32_0 : i32, i32
  }
  func.func @transform_3(%arg0: i32) -> (i32, i32, i32) {
    %c0_i32 = arith.constant 0 : i32
    %c0_i32_0 = arith.constant 0 : i32
    %c0_i32_1 = arith.constant 0 : i32
    return %arg0, %c0_i32, %c0_i32_0 : i32, i32, i32
  }
}

</mosaic_0001>

<llo_original>
// kernel: tpu_custom_call.1
$region0: #{tpu_custom_call.1}
  #allocation0 [shape = 'u32[]', space=smem, size = 0x4, offset = 0x4, fixed_abs, tag = 'smem constant byte address 0x4 - core index']
  #allocation1 [shape = 'u32[144,128]{1,0:T(1,128)}', space=vmem, size = 0x12000, scoped, tag = 'internal scratch']
  #allocation2 [shape = 'f32[72,512]{1,0:T(8,128)}', space=vmem, size = 0x24000, scoped, tag = 'scratch operand']
  %s0 = inlined_call_operand.hbm [shape: f32[2,8,290], index: 0, kind: input, shape index: {}]
  %s1 = inlined_call_operand.vmem [shape: f32[16,72], index: 1, kind: input, shape index: {}]
  %s2 = inlined_call_operand.vmem [shape: f32[16,1], index: 2, kind: input, shape index: {}]
  %s3 = inlined_call_operand.hbm [shape: f32[2,16,256], index: 3, kind: output, shape index: {}]
  %s4 = sld [smem:[#allocation0]]
  $region26: #{tpu_custom_call.1} parent=0
    _
  %s6 = ssub.s32 1, %s4
  %s7 = scalar_select 0, %s6, %s4
  $region1: #{tpu_custom_call.1} parent=0
    #allocation3 [shape = 'u8[24576]{0}', space=vmem, size = 0x6000, scoped, tag = 'input window, operand 0, single buffered']
    #allocation4 [shape = 's32[1]{0}', space=sflag, size = 0x4, scoped, tag = 'scoped memory for tpu_custom_call.1']
    #allocation5 [shape = 's32[1]{0}', space=sflag, size = 0x4, scoped, tag = 'scoped memory for tpu_custom_call.1']
    #allocation6 [shape = 'u8[32768]{0}', space=vmem, size = 0x8000, scoped, tag = 'output window, operand 0, single buffered']
    %8 = vsyncpa [#allocation4], 0
    %9 = vsyncpa [#allocation5], 0
    // Predicated region
    $region2: #{tpu_custom_call.1} parent=1 // pred_check
      _
    $region3: #{tpu_custom_call.1} parent=1 // pred_check_branch
      %11 = sbr.rel (0) target = $region5
    $region4: #{tpu_custom_call.1} parent=1 // pred_region
      %s13 = ssub.s32 768, 768
      %14 = vsyncadd [#allocation4], %s13
      %s15 = sshll.u32 [#allocation3], 4
      %s16 = int_to_ptr.vmem [resolvable:$true] %s15
      %21 = dma.hbm_to_vmem [thread:$0]  %s0, 768, %s16, [#allocation4], 384, 384, 24
    $region5: #{tpu_custom_call.1} parent=1 // pred_fallthru
      _
    // Predicated region
    $region6: #{tpu_custom_call.1} parent=1 // pred_check
      _
    $region7: #{tpu_custom_call.1} parent=1 // pred_check_branch
      %23 = sbr.rel (0) target = $region9
    $region8: #{tpu_custom_call.1} parent=1 // pred_region
      _
    $region9: #{tpu_custom_call.1} parent=1 // pred_fallthru
      _
    // Predicated region
    $region10: #{tpu_custom_call.1} parent=1 // pred_check
      _
    $region11: #{tpu_custom_call.1} parent=1 // pred_check_branch
      %25 = sbr.rel (0) target = $region13
    $region12: #{tpu_custom_call.1} parent=1 // pred_region
      _
    $region13: #{tpu_custom_call.1} parent=1 // pred_fallthru
      _
    // Predicated region
    $region14: #{tpu_custom_call.1} parent=1 // pred_check
      _
    $region15: #{tpu_custom_call.1} parent=1 // pred_check_branch
      %27 = sbr.rel (0) target = $region17
    $region16: #{tpu_custom_call.1} parent=1 // pred_region
      %28 = dma.done [#allocation4], 768
    $region17: #{tpu_custom_call.1} parent=1 // pred_fallthru
      _
    %v29 = vld [vmem:[#allocation3] sm:$0xff]
    %v30 = vld [vmem:[#allocation3 + $0x8] sm:$0xff]
    %31 = vst [vmem:[#allocation2] sm:$0xff] %v29
    %32 = vst [vmem:[#allocation2 + $0x8] sm:$0xff] %v30
    %v33 = vld [vmem:[#allocation3] sm:$0xff]
    %v34 = vld [vmem:[#allocation3 + $0x8] sm:$0xff]
    %v35 = vld [vmem:[#allocation3 + $0x10] sm:$0xff]
    %39 = vrot.lane.b32.xlu0 %v33, 127
    %v40 = vpop.permute.xlu0 %39
    %41 = vrot.lane.b32.xlu0 %v34, 127
    %v42 = vpop.permute.xlu0 %41
    %43 = vrot.lane.b32.xlu0 %v35, 127
    %v44 = vpop.permute.xlu0 %43
    %vm45 = vcmask 1039360
    %v46 = vsel %vm45, %v40, %v42
    %v47 = vsel %vm45, %v42, %v44
    %50 = vst [vmem:[#allocation2 + $0x20] sm:$0xff] %v46
    %51 = vst [vmem:[#allocation2 + $0x28] sm:$0xff] %v47
    %v52 = vld [vmem:[#allocation3] sm:$0xff]
    %v53 = vld [vmem:[#allocation3 + $0x8] sm:$0xff]
    %v54 = vld [vmem:[#allocation3 + $0x10] sm:$0xff]
    %58 = vrot.lane.b32.xlu0 %v52, 126
    %v59 = vpop.permute.xlu0 %58
    %60 = vrot.lane.b32.xlu0 %v53, 126
    %v61 = vpop.permute.xlu0 %60
    %62 = vrot.lane.b32.xlu0 %v54, 126
    %v63 = vpop.permute.xlu0 %62
    %vm64 = vcmask 1031168
    %v65 = vsel %vm64, %v59, %v61
    %v66 = vsel %vm64, %v61, %v63
    %69 = vst [vmem:[#allocation2 + $0x40] sm:$0xff] %v65
    %70 = vst [vmem:[#allocation2 + $0x48] sm:$0xff] %v66
    %v71 = vld [vmem:[#allocation3] sm:$0xff]
    %v72 = vld [vmem:[#allocation3 + $0x8] sm:$0xff]
    %v73 = vld [vmem:[#allocation3 + $0x10] sm:$0xff]
    %77 = vrot.lane.b32.xlu0 %v71, 112
    %v78 = vpop.permute.xlu0 %77
    %79 = vrot.lane.b32.xlu0 %v72, 112
    %v80 = vpop.permute.xlu0 %79
    %81 = vrot.lane.b32.xlu0 %v73, 112
    %v82 = vpop.permute.xlu0 %81
    %vm83 = vcmask 916480
    %v84 = vsel %vm83, %v78, %v80
    %v85 = vsel %vm83, %v80, %v82
    %88 = vst [vmem:[#allocation2 + $0x60] sm:$0xff] %v84
    %89 = vst [vmem:[#allocation2 + $0x68] sm:$0xff] %v85
    %v90 = vld [vmem:[#allocation3] sm:$0xff]
    %v91 = vld [vmem:[#allocation3 + $0x8] sm:$0xff]
    %v92 = vld [vmem:[#allocation3 + $0x10] sm:$0xff]
    %96 = vrot.lane.b32.xlu0 %v90, 111
    %v97 = vpop.permute.xlu0 %96
    %98 = vrot.lane.b32.xlu0 %v91, 111
    %v99 = vpop.permute.xlu0 %98
    %100 = vrot.lane.b32.xlu0 %v92, 111
    %v101 = vpop.permute.xlu0 %100
    %vm102 = vcmask 908288
    %v103 = vsel %vm102, %v97, %v99
    %v104 = vsel %vm102, %v99, %v101
    %107 = vst [vmem:[#allocation2 + $0x80] sm:$0xff] %v103
    %108 = vst [vmem:[#allocation2 + $0x88] sm:$0xff] %v104
    %v109 = vld [vmem:[#allocation3] sm:$0xff]
    %v110 = vld [vmem:[#allocation3 + $0x8] sm:$0xff]
    %v111 = vld [vmem:[#allocation3 + $0x10] sm:$0xff]
    %115 = vrot.lane.b32.xlu0 %v109, 110
    %v116 = vpop.permute.xlu0 %115
    %117 = vrot.lane.b32.xlu0 %v110, 110
    %v118 = vpop.permute.xlu0 %117
    %119 = vrot.lane.b32.xlu0 %v111, 110
    %v120 = vpop.permute.xlu0 %119
    %vm121 = vcmask 900096
    %v122 = vsel %vm121, %v116, %v118
    %v123 = vsel %vm121, %v118, %v120
    %126 = vst [vmem:[#allocation2 + $0xa0] sm:$0xff] %v122
    %127 = vst [vmem:[#allocation2 + $0xa8] sm:$0xff] %v123
    %v128 = vld [vmem:[#allocation3] sm:$0xff]
    %v129 = vld [vmem:[#allocation3 + $0x8] sm:$0xff]
    %v130 = vld [vmem:[#allocation3 + $0x10] sm:$0xff]
    %134 = vrot.lane.b32.xlu0 %v128, 96
    %v135 = vpop.permute.xlu0 %134
    %136 = vrot.lane.b32.xlu0 %v129, 96
    %v137 = vpop.permute.xlu0 %136
    %138 = vrot.lane.b32.xlu0 %v130, 96
    %v139 = vpop.permute.xlu0 %138
    %vm140 = vcmask 785408
    %v141 = vsel %vm140, %v135, %v137
    %v142 = vsel %vm140, %v137, %v139
    %145 = vst [vmem:[#allocation2 + $0xc0] sm:$0xff] %v141
    %146 = vst [vmem:[#allocation2 + $0xc8] sm:$0xff] %v142
    %v147 = vld [vmem:[#allocation3] sm:$0xff]
    %v148 = vld [vmem:[#allocation3 + $0x8] sm:$0xff]
    %v149 = vld [vmem:[#allocation3 + $0x10] sm:$0xff]
    %153 = vrot.lane.b32.xlu0 %v147, 95
    %v154 = vpop.permute.xlu0 %153
    %155 = vrot.lane.b32.xlu0 %v148, 95
    %v156 = vpop.permute.xlu0 %155
    %157 = vrot.lane.b32.xlu0 %v149, 95
    %v158 = vpop.permute.xlu0 %157
    %vm159 = vcmask 777216
    %v160 = vsel %vm159, %v154, %v156
    %v161 = vsel %vm159, %v156, %v158
    %164 = vst [vmem:[#allocation2 + $0xe0] sm:$0xff] %v160
    %165 = vst [vmem:[#allocation2 + $0xe8] sm:$0xff] %v161
    %v166 = vld [vmem:[#allocation3] sm:$0xff]
    %v167 = vld [vmem:[#allocation3 + $0x8] sm:$0xff]
    %v168 = vld [vmem:[#allocation3 + $0x10] sm:$0xff]
    %172 = vrot.lane.b32.xlu0 %v166, 94
    %v173 = vpop.permute.xlu0 %172
    %174 = vrot.lane.b32.xlu0 %v167, 94
    %v175 = vpop.permute.xlu0 %174
    %176 = vrot.lane.b32.xlu0 %v168, 94
    %v177 = vpop.permute.xlu0 %176
    %vm178 = vcmask 769024
    %v179 = vsel %vm178, %v173, %v175
    %v180 = vsel %vm178, %v175, %v177
    %183 = vst [vmem:[#allocation2 + $0x100] sm:$0xff] %v179
    %184 = vst [vmem:[#allocation2 + $0x108] sm:$0xff] %v180
    %s185 = scalar_lea.vmem [#allocation3], 24
    %v186 = vld [vmem:[%s185] sm:$0xff]
    %v187 = vld [vmem:[%s185 + $0x8] sm:$0xff]
    %188 = vst [vmem:[#allocation2 + $0x10] sm:$0xff] %v186
    %189 = vst [vmem:[#allocation2 + $0x18] sm:$0xff] %v187
    %v190 = vld [vmem:[%s185] sm:$0xff]
    %v191 = vld [vmem:[%s185 + $0x8] sm:$0xff]
    %v192 = vld [vmem:[%s185 + $0x10] sm:$0xff]
    %196 = vrot.lane.b32.xlu0 %v190, 127
    %v197 = vpop.permute.xlu0 %196
    %198 = vrot.lane.b32.xlu0 %v191, 127
    %v199 = vpop.permute.xlu0 %198
    %200 = vrot.lane.b32.xlu0 %v192, 127
    %v201 = vpop.permute.xlu0 %200
    %v202 = vsel %vm45, %v197, %v199
    %v203 = vsel %vm45, %v199, %v201
    %206 = vst [vmem:[#allocation2 + $0x30] sm:$0xff] %v202
    %207 = vst [vmem:[#allocation2 + $0x38] sm:$0xff] %v203
    %v208 = vld [vmem:[%s185] sm:$0xff]
    %v209 = vld [vmem:[%s185 + $0x8] sm:$0xff]
    %v210 = vld [vmem:[%s185 + $0x10] sm:$0xff]
    %214 = vrot.lane.b32.xlu0 %v208, 126
    %v215 = vpop.permute.xlu0 %214
    %216 = vrot.lane.b32.xlu0 %v209, 126
    %v217 = vpop.permute.xlu0 %216
    %218 = vrot.lane.b32.xlu0 %v210, 126
    %v219 = vpop.permute.xlu0 %218
    %v220 = vsel %vm64, %v215, %v217
    %v221 = vsel %vm64, %v217, %v219
    %224 = vst [vmem:[#allocation2 + $0x50] sm:$0xff] %v220
    %225 = vst [vmem:[#allocation2 + $0x58] sm:$0xff] %v221
    %v226 = vld [vmem:[%s185] sm:$0xff]
    %v227 = vld [vmem:[%s185 + $0x8] sm:$0xff]
    %v228 = vld [vmem:[%s185 + $0x10] sm:$0xff]
    %232 = vrot.lane.b32.xlu0 %v226, 112
    %v233 = vpop.permute.xlu0 %232
    %234 = vrot.lane.b32.xlu0 %v227, 112
    %v235 = vpop.permute.xlu0 %234
    %236 = vrot.lane.b32.xlu0 %v228, 112
    %v237 = vpop.permute.xlu0 %236
    %v238 = vsel %vm83, %v233, %v235
    %v239 = vsel %vm83, %v235, %v237
    %242 = vst [vmem:[#allocation2 + $0x70] sm:$0xff] %v238
    %243 = vst [vmem:[#allocation2 + $0x78] sm:$0xff] %v239
    %v244 = vld [vmem:[%s185] sm:$0xff]
    %v245 = vld [vmem:[%s185 + $0x8] sm:$0xff]
    %v246 = vld [vmem:[%s185 + $0x10] sm:$0xff]
    %250 = vrot.lane.b32.xlu0 %v244, 111
    %v251 = vpop.permute.xlu0 %250
    %252 = vrot.lane.b32.xlu0 %v245, 111
    %v253 = vpop.permute.xlu0 %252
    %254 = vrot.lane.b32.xlu0 %v246, 111
    %v255 = vpop.permute.xlu0 %254
    %v256 = vsel %vm102, %v251, %v253
    %v257 = vsel %vm102, %v253, %v255
    %260 = vst [vmem:[#allocation2 + $0x90] sm:$0xff] %v256
    %261 = vst [vmem:[#allocation2 + $0x98] sm:$0xff] %v257
    %v262 = vld [vmem:[%s185] sm:$0xff]
    %v263 = vld [vmem:[%s185 + $0x8] sm:$0xff]
    %v264 = vld [vmem:[%s185 + $0x10] sm:$0xff]
    %268 = vrot.lane.b32.xlu0 %v262, 110
    %v269 = vpop.permute.xlu0 %268
    %270 = vrot.lane.b32.xlu0 %v263, 110
    %v271 = vpop.permute.xlu0 %270
    %272 = vrot.lane.b32.xlu0 %v264, 110
    %v273 = vpop.permute.xlu0 %272
    %v274 = vsel %vm121, %v269, %v271
    %v275 = vsel %vm121, %v271, %v273
    %278 = vst [vmem:[#allocation2 + $0xb0] sm:$0xff] %v274
    %279 = vst [vmem:[#allocation2 + $0xb8] sm:$0xff] %v275
    %v280 = vld [vmem:[%s185] sm:$0xff]
    %v281 = vld [vmem:[%s185 + $0x8] sm:$0xff]
    %v282 = vld [vmem:[%s185 + $0x10] sm:$0xff]
    %286 = vrot.lane.b32.xlu0 %v280, 96
    %v287 = vpop.permute.xlu0 %286
    %288 = vrot.lane.b32.xlu0 %v281, 96
    %v289 = vpop.permute.xlu0 %288
    %290 = vrot.lane.b32.xlu0 %v282, 96
    %v291 = vpop.permute.xlu0 %290
    %v292 = vsel %vm140, %v287, %v289
    %v293 = vsel %vm140, %v289, %v291
    %296 = vst [vmem:[#allocation2 + $0xd0] sm:$0xff] %v292
    %297 = vst [vmem:[#allocation2 + $0xd8] sm:$0xff] %v293
    %v298 = vld [vmem:[%s185] sm:$0xff]
    %v299 = vld [vmem:[%s185 + $0x8] sm:$0xff]
    %v300 = vld [vmem:[%s185 + $0x10] sm:$0xff]
    %304 = vrot.lane.b32.xlu0 %v298, 95
    %v305 = vpop.permute.xlu0 %304
    %306 = vrot.lane.b32.xlu0 %v299, 95
    %v307 = vpop.permute.xlu0 %306
    %308 = vrot.lane.b32.xlu0 %v300, 95
    %v309 = vpop.permute.xlu0 %308
    %v310 = vsel %vm159, %v305, %v307
    %v311 = vsel %vm159, %v307, %v309
    %314 = vst [vmem:[#allocation2 + $0xf0] sm:$0xff] %v310
    %315 = vst [vmem:[#allocation2 + $0xf8] sm:$0xff] %v311
    %v316 = vld [vmem:[%s185] sm:$0xff]
    %v317 = vld [vmem:[%s185 + $0x8] sm:$0xff]
    %v318 = vld [vmem:[%s185 + $0x10] sm:$0xff]
    %322 = vrot.lane.b32.xlu0 %v316, 94
    %v323 = vpop.permute.xlu0 %322
    %324 = vrot.lane.b32.xlu0 %v317, 94
    %v325 = vpop.permute.xlu0 %324
    %326 = vrot.lane.b32.xlu0 %v318, 94
    %v327 = vpop.permute.xlu0 %326
    %v328 = vsel %vm178, %v323, %v325
    %v329 = vsel %vm178, %v325, %v327
    %332 = vst [vmem:[#allocation2 + $0x110] sm:$0xff] %v328
    %333 = vst [vmem:[#allocation2 + $0x118] sm:$0xff] %v329
    %v334 = vld [vmem:[%s1] sm:$0xff]
    %v335 = vld [vmem:[%s1 + $0x8] sm:$0xff]
    %v336 = vld [vmem:[#allocation2] sm:$0xff]
    %v337 = vld [vmem:[#allocation2 + $0x8] sm:$0xff]
    %v338 = vld [vmem:[#allocation2 + $0x10] sm:$0xff]
    %v339 = vld [vmem:[#allocation2 + $0x18] sm:$0xff]
    %v340 = vld [vmem:[#allocation2 + $0x20] sm:$0xff]
    %v341 = vld [vmem:[#allocation2 + $0x28] sm:$0xff]
    %v342 = vld [vmem:[#allocation2 + $0x30] sm:$0xff]
    %v343 = vld [vmem:[#allocation2 + $0x38] sm:$0xff]
    %v344 = vld [vmem:[#allocation2 + $0x40] sm:$0xff]
    %v345 = vld [vmem:[#allocation2 + $0x48] sm:$0xff]
    %v346 = vld [vmem:[#allocation2 + $0x50] sm:$0xff]
    %v347 = vld [vmem:[#allocation2 + $0x58] sm:$0xff]
    %v348 = vld [vmem:[#allocation2 + $0x60] sm:$0xff]
    %v349 = vld [vmem:[#allocation2 + $0x68] sm:$0xff]
    %v350 = vld [vmem:[#allocation2 + $0x70] sm:$0xff]
    %v351 = vld [vmem:[#allocation2 + $0x78] sm:$0xff]
    %v352 = vld [vmem:[#allocation2 + $0x80] sm:$0xff]
    %v353 = vld [vmem:[#allocation2 + $0x88] sm:$0xff]
    %v354 = vld [vmem:[#allocation2 + $0x90] sm:$0xff]
    %v355 = vld [vmem:[#allocation2 + $0x98] sm:$0xff]
    %v356 = vld [vmem:[#allocation2 + $0xa0] sm:$0xff]
    %v357 = vld [vmem:[#allocation2 + $0xa8] sm:$0xff]
    %v358 = vld [vmem:[#allocation2 + $0xb0] sm:$0xff]
    %v359 = vld [vmem:[#allocation2 + $0xb8] sm:$0xff]
    %v360 = vld [vmem:[#allocation2 + $0xc0] sm:$0xff]
    %v361 = vld [vmem:[#allocation2 + $0xc8] sm:$0xff]
    %v362 = vld [vmem:[#allocation2 + $0xd0] sm:$0xff]
    %v363 = vld [vmem:[#allocation2 + $0xd8] sm:$0xff]
    %v364 = vld [vmem:[#allocation2 + $0xe0] sm:$0xff]
    %v365 = vld [vmem:[#allocation2 + $0xe8] sm:$0xff]
    %v366 = vld [vmem:[#allocation2 + $0xf0] sm:$0xff]
    %v367 = vld [vmem:[#allocation2 + $0xf8] sm:$0xff]
    %v368 = vld [vmem:[#allocation2 + $0x100] sm:$0xff]
    %v369 = vld [vmem:[#allocation2 + $0x108] sm:$0xff]
    %v370 = vld [vmem:[#allocation2 + $0x110] sm:$0xff]
    %v371 = vld [vmem:[#allocation2 + $0x118] sm:$0xff]
    %v372 = vld [vmem:[%s2] sm:$0xff]
    %v373 = vld [vmem:[%s2 + $0x8] sm:$0xff]
    %375 = vset.pattern.permute.xlu0 0
    %376 = vperm.xlu0 %375, %v372
    %v377 = vpop.permute.xlu0 %376
    %380 = vset.pattern.permute.xlu0 0
    %381 = vperm.xlu0 %380, %v373
    %v382 = vpop.permute.xlu0 %381
    %vm384 = vcmask 588800
    %v386 = vsel %vm384, %v334, 0
    %v389 = vsel %vm384, %v335, 0
    %v391 = vand.u32 %v337, 4294901760
    %392 = vmatprep.subr.mxu0 %v391
    %v393 = vand.u32 %v336, 4294901760
    %394 = vmatpush1.msra.mxu0 %v393
    %v395 = vand.u32 %v341, 4294901760
    %396 = vmatprep.subr.mxu0 %v395
    %v397 = vand.u32 %v340, 4294901760
    %398 = vmatpush1.msra.mxu0 %v397
    %v399 = vand.u32 %v345, 4294901760
    %400 = vmatprep.subr.mxu0 %v399
    %v401 = vand.u32 %v344, 4294901760
    %402 = vmatpush1.msra.mxu0 %v401
    %v403 = vand.u32 %v349, 4294901760
    %404 = vmatprep.subr.mxu0 %v403
    %v405 = vand.u32 %v348, 4294901760
    %406 = vmatpush1.msra.mxu0 %v405
    %v407 = vand.u32 %v353, 4294901760
    %408 = vmatprep.subr.mxu0 %v407
    %v409 = vand.u32 %v352, 4294901760
    %410 = vmatpush1.msra.mxu0 %v409
    %v411 = vand.u32 %v357, 4294901760
    %412 = vmatprep.subr.mxu0 %v411
    %v413 = vand.u32 %v356, 4294901760
    %414 = vmatpush1.msra.mxu0 %v413
    %v415 = vand.u32 %v361, 4294901760
    %416 = vmatprep.subr.mxu0 %v415
    %v417 = vand.u32 %v360, 4294901760
    %418 = vmatpush1.msra.mxu0 %v417
    %v419 = vand.u32 %v365, 4294901760
    %420 = vmatprep.subr.mxu0 %v419
    %v421 = vand.u32 %v364, 4294901760
    %422 = vmatpush1.msra.mxu0 %v421
    %v423 = vand.u32 %v369, 4294901760
    %424 = vmatprep.subr.mxu0 %v423
    %v425 = vand.u32 %v368, 4294901760
    %426 = vmatpush1.msra.mxu0 %v425
    %427 = vmatprep.subr.mxu0 0.0
    %428 = vmatpush1.msra.mxu0 0.0
    %429 = vmatprep.subr.mxu0 0.0
    %430 = vmatpush1.msra.mxu0 0.0
    %431 = vmatprep.subr.mxu0 0.0
    %432 = vmatpush1.msra.mxu0 0.0
    %433 = vmatprep.subr.mxu0 0.0
    %434 = vmatpush1.msra.mxu0 0.0
    %435 = vmatprep.subr.mxu0 0.0
    %436 = vmatpush1.msra.mxu0 0.0
    %437 = vmatprep.subr.mxu0 0.0
    %438 = vmatpush1.msra.mxu0 0.0
    %439 = vmatprep.subr.mxu0 0.0
    %440 = vmatpush1.msra.mxu0 0.0
    %441 = vmatprep.subr.mxu0 0.0
    %442 = vmatpush1.msra.mxu0 0.0
    %443 = vmatprep.subr.mxu0 0.0
    %444 = vmatpush1.msra.mxu0 0.0
    %445 = vmatprep.subr.mxu0 0.0
    %446 = vmatpush1.msra.mxu0 0.0
    %447 = vmatprep.subr.mxu0 0.0
    %448 = vmatpush1.msra.mxu0 0.0
    %449 = vmatprep.subr.mxu0 0.0
    %450 = vmatpush1.msra.mxu0 0.0
    %451 = vmatprep.subr.mxu0 0.0
    %452 = vmatpush1.msra.mxu0 0.0
    %453 = vmatprep.subr.mxu0 0.0
    %454 = vmatpush1.msra.mxu0 0.0
    %455 = vmatprep.subr.mxu0 0.0
    %456 = vmatpush1.msra.mxu0 0.0
    %457 = vmatprep.subr.mxu0 0.0
    %458 = vmatpush1.msra.mxu0 0.0
    %459 = vmatprep.subr.mxu0 0.0
    %460 = vmatpush1.msra.mxu0 0.0
    %461 = vmatprep.subr.mxu0 0.0
    %462 = vmatpush1.msra.mxu0 0.0
    %463 = vmatprep.subr.mxu0 0.0
    %464 = vmatpush1.msra.mxu0 0.0
    %465 = vmatprep.subr.mxu0 0.0
    %466 = vmatpush1.msra.mxu0 0.0
    %467 = vmatprep.subr.mxu0 0.0
    %468 = vmatpush1.msra.mxu0 0.0
    %469 = vmatprep.subr.mxu0 0.0
    %470 = vmatpush1.msra.mxu0 0.0
    %471 = vmatprep.subr.mxu0 0.0
    %472 = vmatpush1.msra.mxu0 0.0
    %473 = vmatprep.mubr.f32.mxu0 0.0
    %v474 = vand.u32 %v386, 4294901760
    %v475 = vsub.f32 %v386, %v474
    %v476 = vand.u32 %v475, 4294901760
    %v477 = vsub.f32 %v475, %v476
    %v478 = vand.u32 %v477, 4294901760
    %479 = vmatmul.mubr.f32.gmra.mrb[0].mxu0 %v478
    %v480 = vpop.f32.mrb[0].mxu0
    %v481 = vadd.f32 %v377, %v480
    %v482 = vpop.f32.mrb[0].mxu0
    %v483 = vadd.f32 %v377, %v482
    %484 = vmatprep.mubr.f32.mxu0 0.0
    %v485 = vand.u32 %v389, 4294901760
    %v486 = vsub.f32 %v389, %v485
    %v487 = vand.u32 %v486, 4294901760
    %v488 = vsub.f32 %v486, %v487
    %v489 = vand.u32 %v488, 4294901760
    %490 = vmatmul.mubr.f32.gmra.mrb[0].mxu0 %v489
    %v491 = vpop.f32.mrb[0].mxu0
    %v492 = vadd.f32 %v382, %v491
    %v493 = vpop.f32.mrb[0].mxu0
    %v494 = vadd.f32 %v382, %v493
    %495 = vdwg.mxu0
    %v496 = vand.u32 %v337, 4294901760
    %v497 = vsub.f32 %v337, %v496
    %v498 = vand.u32 %v497, 4294901760
    %v499 = vsub.f32 %v497, %v498
    %v500 = vand.u32 %v499, 4294901760
    %501 = vmatprep.subr.mxu0 %v500
    %v502 = vand.u32 %v336, 4294901760
    %v503 = vsub.f32 %v336, %v502
    %v504 = vand.u32 %v503, 4294901760
    %v505 = vsub.f32 %v503, %v504
    %v506 = vand.u32 %v505, 4294901760
    %507 = vmatpush1.msra.mxu0 %v506
    %v508 = vand.u32 %v341, 4294901760
    %v509 = vsub.f32 %v341, %v508
    %v510 = vand.u32 %v509, 4294901760
    %v511 = vsub.f32 %v509, %v510
    %v512 = vand.u32 %v511, 4294901760
    %513 = vmatprep.subr.mxu0 %v512
    %v514 = vand.u32 %v340, 4294901760
    %v515 = vsub.f32 %v340, %v514
    %v516 = vand.u32 %v515, 4294901760
    %v517 = vsub.f32 %v515, %v516
    %v518 = vand.u32 %v517, 4294901760
    %519 = vmatpush1.msra.mxu0 %v518
    %v520 = vand.u32 %v345, 4294901760
    %v521 = vsub.f32 %v345, %v520
    %v522 = vand.u32 %v521, 4294901760
    %v523 = vsub.f32 %v521, %v522
    %v524 = vand.u32 %v523, 4294901760
    %525 = vmatprep.subr.mxu0 %v524
    %v526 = vand.u32 %v344, 4294901760
    %v527 = vsub.f32 %v344, %v526
    %v528 = vand.u32 %v527, 4294901760
    %v529 = vsub.f32 %v527, %v528
    %v530 = vand.u32 %v529, 4294901760
    %531 = vmatpush1.msra.mxu0 %v530
    %v532 = vand.u32 %v349, 4294901760
    %v533 = vsub.f32 %v349, %v532
    %v534 = vand.u32 %v533, 4294901760
    %v535 = vsub.f32 %v533, %v534
    %v536 = vand.u32 %v535, 4294901760
    %537 = vmatprep.subr.mxu0 %v536
    %v538 = vand.u32 %v348, 4294901760
    %v539 = vsub.f32 %v348, %v538
    %v540 = vand.u32 %v539, 4294901760
    %v541 = vsub.f32 %v539, %v540
    %v542 = vand.u32 %v541, 4294901760
    %543 = vmatpush1.msra.mxu0 %v542
    %v544 = vand.u32 %v353, 4294901760
    %v545 = vsub.f32 %v353, %v544
    %v546 = vand.u32 %v545, 4294901760
    %v547 = vsub.f32 %v545, %v546
    %v548 = vand.u32 %v547, 4294901760
    %549 = vmatprep.subr.mxu0 %v548
    %v550 = vand.u32 %v352, 4294901760
    %v551 = vsub.f32 %v352, %v550
    %v552 = vand.u32 %v551, 4294901760
    %v553 = vsub.f32 %v551, %v552
    %v554 = vand.u32 %v553, 4294901760
    %555 = vmatpush1.msra.mxu0 %v554
    %v556 = vand.u32 %v357, 4294901760
    %v557 = vsub.f32 %v357, %v556
    %v558 = vand.u32 %v557, 4294901760
    %v559 = vsub.f32 %v557, %v558
    %v560 = vand.u32 %v559, 4294901760
    %561 = vmatprep.subr.mxu0 %v560
    %v562 = vand.u32 %v356, 4294901760
    %v563 = vsub.f32 %v356, %v562
    %v564 = vand.u32 %v563, 4294901760
    %v565 = vsub.f32 %v563, %v564
    %v566 = vand.u32 %v565, 4294901760
    %567 = vmatpush1.msra.mxu0 %v566
    %v568 = vand.u32 %v361, 4294901760
    %v569 = vsub.f32 %v361, %v568
    %v570 = vand.u32 %v569, 4294901760
    %v571 = vsub.f32 %v569, %v570
    %v572 = vand.u32 %v571, 4294901760
    %573 = vmatprep.subr.mxu0 %v572
    %v574 = vand.u32 %v360, 4294901760
    %v575 = vsub.f32 %v360, %v574
    %v576 = vand.u32 %v575, 4294901760
    %v577 = vsub.f32 %v575, %v576
    %v578 = vand.u32 %v577, 4294901760
    %579 = vmatpush1.msra.mxu0 %v578
    %v580 = vand.u32 %v365, 4294901760
    %v581 = vsub.f32 %v365, %v580
    %v582 = vand.u32 %v581, 4294901760
    %v583 = vsub.f32 %v581, %v582
    %v584 = vand.u32 %v583, 4294901760
    %585 = vmatprep.subr.mxu0 %v584
    %v586 = vand.u32 %v364, 4294901760
    %v587 = vsub.f32 %v364, %v586
    %v588 = vand.u32 %v587, 4294901760
    %v589 = vsub.f32 %v587, %v588
    %v590 = vand.u32 %v589, 4294901760
    %591 = vmatpush1.msra.mxu0 %v590
    %v592 = vand.u32 %v369, 4294901760
    %v593 = vsub.f32 %v369, %v592
    %v594 = vand.u32 %v593, 4294901760
    %v595 = vsub.f32 %v593, %v594
    %v596 = vand.u32 %v595, 4294901760
    %597 = vmatprep.subr.mxu0 %v596
    %v598 = vand.u32 %v368, 4294901760
    %v599 = vsub.f32 %v368, %v598
    %v600 = vand.u32 %v599, 4294901760
    %v601 = vsub.f32 %v599, %v600
    %v602 = vand.u32 %v601, 4294901760
    %603 = vmatpush1.msra.mxu0 %v602
    %604 = vmatprep.subr.mxu0 0.0
    %605 = vmatpush1.msra.mxu0 0.0
    %606 = vmatprep.subr.mxu0 0.0
    %607 = vmatpush1.msra.mxu0 0.0
    %608 = vmatprep.subr.mxu0 0.0
    %609 = vmatpush1.msra.mxu0 0.0
    %610 = vmatprep.subr.mxu0 0.0
    %611 = vmatpush1.msra.mxu0 0.0
    %612 = vmatprep.subr.mxu0 0.0
    %613 = vmatpush1.msra.mxu0 0.0
    %614 = vmatprep.subr.mxu0 0.0
    %615 = vmatpush1.msra.mxu0 0.0
    %616 = vmatprep.subr.mxu0 0.0
    %617 = vmatpush1.msra.mxu0 0.0
    %618 = vmatprep.subr.mxu0 0.0
    %619 = vmatpush1.msra.mxu0 0.0
    %620 = vmatprep.subr.mxu0 0.0
    %621 = vmatpush1.msra.mxu0 0.0
    %622 = vmatprep.subr.mxu0 0.0
    %623 = vmatpush1.msra.mxu0 0.0
    %624 = vmatprep.subr.mxu0 0.0
    %625 = vmatpush1.msra.mxu0 0.0
    %626 = vmatprep.subr.mxu0 0.0
    %627 = vmatpush1.msra.mxu0 0.0
    %628 = vmatprep.subr.mxu0 0.0
    %629 = vmatpush1.msra.mxu0 0.0
    %630 = vmatprep.subr.mxu0 0.0
    %631 = vmatpush1.msra.mxu0 0.0
    %632 = vmatprep.subr.mxu0 0.0
    %633 = vmatpush1.msra.mxu0 0.0
    %634 = vmatprep.subr.mxu0 0.0
    %635 = vmatpush1.msra.mxu0 0.0
    %636 = vmatprep.subr.mxu0 0.0
    %637 = vmatpush1.msra.mxu0 0.0
    %638 = vmatprep.subr.mxu0 0.0
    %639 = vmatpush1.msra.mxu0 0.0
    %640 = vmatprep.subr.mxu0 0.0
    %641 = vmatpush1.msra.mxu0 0.0
    %642 = vmatprep.subr.mxu0 0.0
    %643 = vmatpush1.msra.mxu0 0.0
    %644 = vmatprep.subr.mxu0 0.0
    %645 = vmatpush1.msra.mxu0 0.0
    %646 = vmatprep.subr.mxu0 0.0
    %647 = vmatpush1.msra.mxu0 0.0
    %648 = vmatprep.subr.mxu0 0.0
    %649 = vmatpush1.msra.mxu0 0.0
    %650 = vmatprep.mubr.f32.mxu0 0.0
    %v651 = vand.u32 %v386, 4294901760
    %652 = vmatmul.mubr.f32.gmra.mrb[0].mxu0 %v651
    %v653 = vpop.f32.mrb[0].mxu0
    %v654 = vadd.f32 %v481, %v653
    %v655 = vpop.f32.mrb[0].mxu0
    %v656 = vadd.f32 %v483, %v655
    %657 = vmatprep.mubr.f32.mxu0 0.0
    %v658 = vand.u32 %v389, 4294901760
    %659 = vmatmul.mubr.f32.gmra.mrb[0].mxu0 %v658
    %v660 = vpop.f32.mrb[0].mxu0
    %v661 = vadd.f32 %v492, %v660
    %v662 = vpop.f32.mrb[0].mxu0
    %v663 = vadd.f32 %v494, %v662
    %664 = vdwg.mxu0
    %v665 = vand.u32 %v337, 4294901760
    %v666 = vsub.f32 %v337, %v665
    %667 = vmatprep.subr.mxu0 %v666
    %v668 = vand.u32 %v336, 4294901760
    %v669 = vsub.f32 %v336, %v668
    %670 = vmatpush1.msra.mxu0 %v669
    %v671 = vand.u32 %v341, 4294901760
    %v672 = vsub.f32 %v341, %v671
    %673 = vmatprep.subr.mxu0 %v672
    %v674 = vand.u32 %v340, 4294901760
    %v675 = vsub.f32 %v340, %v674
    %676 = vmatpush1.msra.mxu0 %v675
    %v677 = vand.u32 %v345, 4294901760
    %v678 = vsub.f32 %v345, %v677
    %679 = vmatprep.subr.mxu0 %v678
    %v680 = vand.u32 %v344, 4294901760
    %v681 = vsub.f32 %v344, %v680
    %682 = vmatpush1.msra.mxu0 %v681
    %v683 = vand.u32 %v349, 4294901760
    %v684 = vsub.f32 %v349, %v683
    %685 = vmatprep.subr.mxu0 %v684
    %v686 = vand.u32 %v348, 4294901760
    %v687 = vsub.f32 %v348, %v686
    %688 = vmatpush1.msra.mxu0 %v687
    %v689 = vand.u32 %v353, 4294901760
    %v690 = vsub.f32 %v353, %v689
    %691 = vmatprep.subr.mxu0 %v690
    %v692 = vand.u32 %v352, 4294901760
    %v693 = vsub.f32 %v352, %v692
    %694 = vmatpush1.msra.mxu0 %v693
    %v695 = vand.u32 %v357, 4294901760
    %v696 = vsub.f32 %v357, %v695
    %697 = vmatprep.subr.mxu0 %v696
    %v698 = vand.u32 %v356, 4294901760
    %v699 = vsub.f32 %v356, %v698
    %700 = vmatpush1.msra.mxu0 %v699
    %v701 = vand.u32 %v361, 4294901760
    %v702 = vsub.f32 %v361, %v701
    %703 = vmatprep.subr.mxu0 %v702
    %v704 = vand.u32 %v360, 4294901760
    %v705 = vsub.f32 %v360, %v704
    %706 = vmatpush1.msra.mxu0 %v705
    %v707 = vand.u32 %v365, 4294901760
    %v708 = vsub.f32 %v365, %v707
    %709 = vmatprep.subr.mxu0 %v708
    %v710 = vand.u32 %v364, 4294901760
    %v711 = vsub.f32 %v364, %v710
    %712 = vmatpush1.msra.mxu0 %v711
    %v713 = vand.u32 %v369, 4294901760
    %v714 = vsub.f32 %v369, %v713
    %715 = vmatprep.subr.mxu0 %v714
    %v716 = vand.u32 %v368, 4294901760
    %v717 = vsub.f32 %v368, %v716
    %718 = vmatpush1.msra.mxu0 %v717
    %719 = vmatprep.subr.mxu0 0.0
    %720 = vmatpush1.msra.mxu0 0.0
    %721 = vmatprep.subr.mxu0 0.0
    %722 = vmatpush1.msra.mxu0 0.0
    %723 = vmatprep.subr.mxu0 0.0
    %724 = vmatpush1.msra.mxu0 0.0
    %725 = vmatprep.subr.mxu0 0.0
    %726 = vmatpush1.msra.mxu0 0.0
    %727 = vmatprep.subr.mxu0 0.0
    %728 = vmatpush1.msra.mxu0 0.0
    %729 = vmatprep.subr.mxu0 0.0
    %730 = vmatpush1.msra.mxu0 0.0
    %731 = vmatprep.subr.mxu0 0.0
    %732 = vmatpush1.msra.mxu0 0.0
    %733 = vmatprep.subr.mxu0 0.0
    %734 = vmatpush1.msra.mxu0 0.0
    %735 = vmatprep.subr.mxu0 0.0
    %736 = vmatpush1.msra.mxu0 0.0
    %737 = vmatprep.subr.mxu0 0.0
    %738 = vmatpush1.msra.mxu0 0.0
    %739 = vmatprep.subr.mxu0 0.0
    %740 = vmatpush1.msra.mxu0 0.0
    %741 = vmatprep.subr.mxu0 0.0
    %742 = vmatpush1.msra.mxu0 0.0
    %743 = vmatprep.subr.mxu0 0.0
    %744 = vmatpush1.msra.mxu0 0.0
    %745 = vmatprep.subr.mxu0 0.0
    %746 = vmatpush1.msra.mxu0 0.0
    %747 = vmatprep.subr.mxu0 0.0
    %748 = vmatpush1.msra.mxu0 0.0
    %749 = vmatprep.subr.mxu0 0.0
    %750 = vmatpush1.msra.mxu0 0.0
    %751 = vmatprep.subr.mxu0 0.0
    %752 = vmatpush1.msra.mxu0 0.0
    %753 = vmatprep.subr.mxu0 0.0
    %754 = vmatpush1.msra.mxu0 0.0
    %755 = vmatprep.subr.mxu0 0.0
    %756 = vmatpush1.msra.mxu0 0.0
    %757 = vmatprep.subr.mxu0 0.0
    %758 = vmatpush1.msra.mxu0 0.0
    %759 = vmatprep.subr.mxu0 0.0
    %760 = vmatpush1.msra.mxu0 0.0
    %761 = vmatprep.subr.mxu0 0.0
    %762 = vmatpush1.msra.mxu0 0.0
    %763 = vmatprep.subr.mxu0 0.0
    %764 = vmatpush1.msra.mxu0 0.0
    %765 = vmatprep.mubr.f32.mxu0 0.0
    %v766 = vand.u32 %v386, 4294901760
    %v767 = vsub.f32 %v386, %v766
    %768 = vmatmul.mubr.f32.gmra.mrb[0].mxu0 %v767
    %v769 = vpop.f32.mrb[0].mxu0
    %v770 = vadd.f32 %v654, %v769
    %v771 = vpop.f32.mrb[0].mxu0
    %v772 = vadd.f32 %v656, %v771
    %773 = vmatprep.mubr.f32.mxu0 0.0
    %v774 = vand.u32 %v389, 4294901760
    %v775 = vsub.f32 %v389, %v774
    %776 = vmatmul.mubr.f32.gmra.mrb[0].mxu0 %v775
    %v777 = vpop.f32.mrb[0].mxu0
    %v778 = vadd.f32 %v661, %v777
    %v779 = vpop.f32.mrb[0].mxu0
    %v780 = vadd.f32 %v663, %v779
    %781 = vdwg.mxu0
    %v782 = vand.u32 %v337, 4294901760
    %783 = vmatprep.subr.mxu0 %v782
    %v784 = vand.u32 %v336, 4294901760
    %785 = vmatpush1.msra.mxu0 %v784
    %v786 = vand.u32 %v341, 4294901760
    %787 = vmatprep.subr.mxu0 %v786
    %v788 = vand.u32 %v340, 4294901760
    %789 = vmatpush1.msra.mxu0 %v788
    %v790 = vand.u32 %v345, 4294901760
    %791 = vmatprep.subr.mxu0 %v790
    %v792 = vand.u32 %v344, 4294901760
    %793 = vmatpush1.msra.mxu0 %v792
    %v794 = vand.u32 %v349, 4294901760
    %795 = vmatprep.subr.mxu0 %v794
    %v796 = vand.u32 %v348, 4294901760
    %797 = vmatpush1.msra.mxu0 %v796
    %v798 = vand.u32 %v353, 4294901760
    %799 = vmatprep.subr.mxu0 %v798
    %v800 = vand.u32 %v352, 4294901760
    %801 = vmatpush1.msra.mxu0 %v800
    %v802 = vand.u32 %v357, 4294901760
    %803 = vmatprep.subr.mxu0 %v802
    %v804 = vand.u32 %v356, 4294901760
    %805 = vmatpush1.msra.mxu0 %v804
    %v806 = vand.u32 %v361, 4294901760
    %807 = vmatprep.subr.mxu0 %v806
    %v808 = vand.u32 %v360, 4294901760
    %809 = vmatpush1.msra.mxu0 %v808
    %v810 = vand.u32 %v365, 4294901760
    %811 = vmatprep.subr.mxu0 %v810
    %v812 = vand.u32 %v364, 4294901760
    %813 = vmatpush1.msra.mxu0 %v812
    %v814 = vand.u32 %v369, 4294901760
    %815 = vmatprep.subr.mxu0 %v814
    %v816 = vand.u32 %v368, 4294901760
    %817 = vmatpush1.msra.mxu0 %v816
    %818 = vmatprep.subr.mxu0 0.0
    %819 = vmatpush1.msra.mxu0 0.0
    %820 = vmatprep.subr.mxu0 0.0
    %821 = vmatpush1.msra.mxu0 0.0
    %822 = vmatprep.subr.mxu0 0.0
    %823 = vmatpush1.msra.mxu0 0.0
    %824 = vmatprep.subr.mxu0 0.0
    %825 = vmatpush1.msra.mxu0 0.0
    %826 = vmatprep.subr.mxu0 0.0
    %827 = vmatpush1.msra.mxu0 0.0
    %828 = vmatprep.subr.mxu0 0.0
    %829 = vmatpush1.msra.mxu0 0.0
    %830 = vmatprep.subr.mxu0 0.0
    %831 = vmatpush1.msra.mxu0 0.0
    %832 = vmatprep.subr.mxu0 0.0
    %833 = vmatpush1.msra.mxu0 0.0
    %834 = vmatprep.subr.mxu0 0.0
    %835 = vmatpush1.msra.mxu0 0.0
    %836 = vmatprep.subr.mxu0 0.0
    %837 = vmatpush1.msra.mxu0 0.0
    %838 = vmatprep.subr.mxu0 0.0
    %839 = vmatpush1.msra.mxu0 0.0
    %840 = vmatprep.subr.mxu0 0.0
    %841 = vmatpush1.msra.mxu0 0.0
    %842 = vmatprep.subr.mxu0 0.0
    %843 = vmatpush1.msra.mxu0 0.0
    %844 = vmatprep.subr.mxu0 0.0
    %845 = vmatpush1.msra.mxu0 0.0
    %846 = vmatprep.subr.mxu0 0.0
    %847 = vmatpush1.msra.mxu0 0.0
    %848 = vmatprep.subr.mxu0 0.0
    %849 = vmatpush1.msra.mxu0 0.0
    %850 = vmatprep.subr.mxu0 0.0
    %851 = vmatpush1.msra.mxu0 0.0
    %852 = vmatprep.subr.mxu0 0.0
    %853 = vmatpush1.msra.mxu0 0.0
    %854 = vmatprep.subr.mxu0 0.0
    %855 = vmatpush1.msra.mxu0 0.0
    %856 = vmatprep.subr.mxu0 0.0
    %857 = vmatpush1.msra.mxu0 0.0
    %858 = vmatprep.subr.mxu0 0.0
    %859 = vmatpush1.msra.mxu0 0.0
    %860 = vmatprep.subr.mxu0 0.0
    %861 = vmatpush1.msra.mxu0 0.0
    %862 = vmatprep.subr.mxu0 0.0
    %863 = vmatpush1.msra.mxu0 0.0
    %864 = vmatprep.mubr.f32.mxu0 0.0
    %v865 = vand.u32 %v386, 4294901760
    %v866 = vsub.f32 %v386, %v865
    %v867 = vand.u32 %v866, 4294901760
    %868 = vmatmul.mubr.f32.gmra.mrb[0].mxu0 %v867
    %v869 = vpop.f32.mrb[0].mxu0
    %v870 = vadd.f32 %v770, %v869
    %v871 = vpop.f32.mrb[0].mxu0
    %v872 = vadd.f32 %v772, %v871
    %873 = vmatprep.mubr.f32.mxu0 0.0
    %v874 = vand.u32 %v389, 4294901760
    %v875 = vsub.f32 %v389, %v874
    %v876 = vand.u32 %v875, 4294901760
    %877 = vmatmul.mubr.f32.gmra.mrb[0].mxu0 %v876
    %v878 = vpop.f32.mrb[0].mxu0
    %v879 = vadd.f32 %v778, %v878
    %v880 = vpop.f32.mrb[0].mxu0
    %v881 = vadd.f32 %v780, %v880
    %882 = vdwg.mxu0
    %v883 = vand.u32 %v337, 4294901760
    %v884 = vsub.f32 %v337, %v883
    %v885 = vand.u32 %v884, 4294901760
    %886 = vmatprep.subr.mxu0 %v885
    %v887 = vand.u32 %v336, 4294901760
    %v888 = vsub.f32 %v336, %v887
    %v889 = vand.u32 %v888, 4294901760
    %890 = vmatpush1.msra.mxu0 %v889
    %v891 = vand.u32 %v341, 4294901760
    %v892 = vsub.f32 %v341, %v891
    %v893 = vand.u32 %v892, 4294901760
    %894 = vmatprep.subr.mxu0 %v893
    %v895 = vand.u32 %v340, 4294901760
    %v896 = vsub.f32 %v340, %v895
    %v897 = vand.u32 %v896, 4294901760
    %898 = vmatpush1.msra.mxu0 %v897
    %v899 = vand.u32 %v345, 4294901760
    %v900 = vsub.f32 %v345, %v899
    %v901 = vand.u32 %v900, 4294901760
    %902 = vmatprep.subr.mxu0 %v901
    %v903 = vand.u32 %v344, 4294901760
    %v904 = vsub.f32 %v344, %v903
    %v905 = vand.u32 %v904, 4294901760
    %906 = vmatpush1.msra.mxu0 %v905
    %v907 = vand.u32 %v349, 4294901760
    %v908 = vsub.f32 %v349, %v907
    %v909 = vand.u32 %v908, 4294901760
    %910 = vmatprep.subr.mxu0 %v909
    %v911 = vand.u32 %v348, 4294901760
    %v912 = vsub.f32 %v348, %v911
    %v913 = vand.u32 %v912, 4294901760
    %914 = vmatpush1.msra.mxu0 %v913
    %v915 = vand.u32 %v353, 4294901760
    %v916 = vsub.f32 %v353, %v915
    %v917 = vand.u32 %v916, 4294901760
    %918 = vmatprep.subr.mxu0 %v917
    %v919 = vand.u32 %v352, 4294901760
    %v920 = vsub.f32 %v352, %v919
    %v921 = vand.u32 %v920, 4294901760
    %922 = vmatpush1.msra.mxu0 %v921
    %v923 = vand.u32 %v357, 4294901760
    %v924 = vsub.f32 %v357, %v923
    %v925 = vand.u32 %v924, 4294901760
    %926 = vmatprep.subr.mxu0 %v925
    %v927 = vand.u32 %v356, 4294901760
    %v928 = vsub.f32 %v356, %v927
    %v929 = vand.u32 %v928, 4294901760
    %930 = vmatpush1.msra.mxu0 %v929
    %v931 = vand.u32 %v361, 4294901760
    %v932 = vsub.f32 %v361, %v931
    %v933 = vand.u32 %v932, 4294901760
    %934 = vmatprep.subr.mxu0 %v933
    %v935 = vand.u32 %v360, 4294901760
    %v936 = vsub.f32 %v360, %v935
    %v937 = vand.u32 %v936, 4294901760
    %938 = vmatpush1.msra.mxu0 %v937
    %v939 = vand.u32 %v365, 4294901760
    %v940 = vsub.f32 %v365, %v939
    %v941 = vand.u32 %v940, 4294901760
    %942 = vmatprep.subr.mxu0 %v941
    %v943 = vand.u32 %v364, 4294901760
    %v944 = vsub.f32 %v364, %v943
    %v945 = vand.u32 %v944, 4294901760
    %946 = vmatpush1.msra.mxu0 %v945
    %v947 = vand.u32 %v369, 4294901760
    %v948 = vsub.f32 %v369, %v947
    %v949 = vand.u32 %v948, 4294901760
    %950 = vmatprep.subr.mxu0 %v949
    %v951 = vand.u32 %v368, 4294901760
    %v952 = vsub.f32 %v368, %v951
    %v953 = vand.u32 %v952, 4294901760
    %954 = vmatpush1.msra.mxu0 %v953
    %955 = vmatprep.subr.mxu0 0.0
    %956 = vmatpush1.msra.mxu0 0.0
    %957 = vmatprep.subr.mxu0 0.0
    %958 = vmatpush1.msra.mxu0 0.0
    %959 = vmatprep.subr.mxu0 0.0
    %960 = vmatpush1.msra.mxu0 0.0
    %961 = vmatprep.subr.mxu0 0.0
    %962 = vmatpush1.msra.mxu0 0.0
    %963 = vmatprep.subr.mxu0 0.0
    %964 = vmatpush1.msra.mxu0 0.0
    %965 = vmatprep.subr.mxu0 0.0
    %966 = vmatpush1.msra.mxu0 0.0
    %967 = vmatprep.subr.mxu0 0.0
    %968 = vmatpush1.msra.mxu0 0.0
    %969 = vmatprep.subr.mxu0 0.0
    %970 = vmatpush1.msra.mxu0 0.0
    %971 = vmatprep.subr.mxu0 0.0
    %972 = vmatpush1.msra.mxu0 0.0
    %973 = vmatprep.subr.mxu0 0.0
    %974 = vmatpush1.msra.mxu0 0.0
    %975 = vmatprep.subr.mxu0 0.0
    %976 = vmatpush1.msra.mxu0 0.0
    %977 = vmatprep.subr.mxu0 0.0
    %978 = vmatpush1.msra.mxu0 0.0
    %979 = vmatprep.subr.mxu0 0.0
    %980 = vmatpush1.msra.mxu0 0.0
    %981 = vmatprep.subr.mxu0 0.0
    %982 = vmatpush1.msra.mxu0 0.0
    %983 = vmatprep.subr.mxu0 0.0
    %984 = vmatpush1.msra.mxu0 0.0
    %985 = vmatprep.subr.mxu0 0.0
    %986 = vmatpush1.msra.mxu0 0.0
    %987 = vmatprep.subr.mxu0 0.0
    %988 = vmatpush1.msra.mxu0 0.0
    %989 = vmatprep.subr.mxu0 0.0
    %990 = vmatpush1.msra.mxu0 0.0
    %991 = vmatprep.subr.mxu0 0.0
    %992 = vmatpush1.msra.mxu0 0.0
    %993 = vmatprep.subr.mxu0 0.0
    %994 = vmatpush1.msra.mxu0 0.0
    %995 = vmatprep.subr.mxu0 0.0
    %996 = vmatpush1.msra.mxu0 0.0
    %997 = vmatprep.subr.mxu0 0.0
    %998 = vmatpush1.msra.mxu0 0.0
    %999 = vmatprep.subr.mxu0 0.0
    %1000 = vmatpush1.msra.mxu0 0.0
    %1001 = vmatprep.mubr.f32.mxu0 0.0
    %v1002 = vand.u32 %v386, 4294901760
    %1003 = vmatmul.mubr.f32.gmra.mrb[0].mxu0 %v1002
    %v1004 = vpop.f32.mrb[0].mxu0
    %v1005 = vadd.f32 %v870, %v1004
    %v1006 = vpop.f32.mrb[0].mxu0
    %v1007 = vadd.f32 %v872, %v1006
    %1008 = vmatprep.mubr.f32.mxu0 0.0
    %v1009 = vand.u32 %v389, 4294901760
    %1010 = vmatmul.mubr.f32.gmra.mrb[0].mxu0 %v1009
    %v1011 = vpop.f32.mrb[0].mxu0
    %v1012 = vadd.f32 %v879, %v1011
    %v1013 = vpop.f32.mrb[0].mxu0
    %v1014 = vadd.f32 %v881, %v1013
    %1015 = vdwg.mxu0
    %v1016 = vand.u32 %v337, 4294901760
    %1017 = vmatprep.subr.mxu0 %v1016
    %v1018 = vand.u32 %v336, 4294901760
    %1019 = vmatpush1.msra.mxu0 %v1018
    %v1020 = vand.u32 %v341, 4294901760
    %1021 = vmatprep.subr.mxu0 %v1020
    %v1022 = vand.u32 %v340, 4294901760
    %1023 = vmatpush1.msra.mxu0 %v1022
    %v1024 = vand.u32 %v345, 4294901760
    %1025 = vmatprep.subr.mxu0 %v1024
    %v1026 = vand.u32 %v344, 4294901760
    %1027 = vmatpush1.msra.mxu0 %v1026
    %v1028 = vand.u32 %v349, 4294901760
    %1029 = vmatprep.subr.mxu0 %v1028
    %v1030 = vand.u32 %v348, 4294901760
    %1031 = vmatpush1.msra.mxu0 %v1030
    %v1032 = vand.u32 %v353, 4294901760
    %1033 = vmatprep.subr.mxu0 %v1032
    %v1034 = vand.u32 %v352, 4294901760
    %1035 = vmatpush1.msra.mxu0 %v1034
    %v1036 = vand.u32 %v357, 4294901760
    %1037 = vmatprep.subr.mxu0 %v1036
    %v1038 = vand.u32 %v356, 4294901760
    %1039 = vmatpush1.msra.mxu0 %v1038
    %v1040 = vand.u32 %v361, 4294901760
    %1041 = vmatprep.subr.mxu0 %v1040
    %v1042 = vand.u32 %v360, 4294901760
    %1043 = vmatpush1.msra.mxu0 %v1042
    %v1044 = vand.u32 %v365, 4294901760
    %1045 = vmatprep.subr.mxu0 %v1044
    %v1046 = vand.u32 %v364, 4294901760
    %1047 = vmatpush1.msra.mxu0 %v1046
    %v1048 = vand.u32 %v369, 4294901760
    %1049 = vmatprep.subr.mxu0 %v1048
    %v1050 = vand.u32 %v368, 4294901760
    %1051 = vmatpush1.msra.mxu0 %v1050
    %1052 = vmatprep.subr.mxu0 0.0
    %1053 = vmatpush1.msra.mxu0 0.0
    %1054 = vmatprep.subr.mxu0 0.0
    %1055 = vmatpush1.msra.mxu0 0.0
    %1056 = vmatprep.subr.mxu0 0.0
    %1057 = vmatpush1.msra.mxu0 0.0
    %1058 = vmatprep.subr.mxu0 0.0
    %1059 = vmatpush1.msra.mxu0 0.0
    %1060 = vmatprep.subr.mxu0 0.0
    %1061 = vmatpush1.msra.mxu0 0.0
    %1062 = vmatprep.subr.mxu0 0.0
    %1063 = vmatpush1.msra.mxu0 0.0
    %1064 = vmatprep.subr.mxu0 0.0
    %1065 = vmatpush1.msra.mxu0 0.0
    %1066 = vmatprep.subr.mxu0 0.0
    %1067 = vmatpush1.msra.mxu0 0.0
    %1068 = vmatprep.subr.mxu0 0.0
    %1069 = vmatpush1.msra.mxu0 0.0
    %1070 = vmatprep.subr.mxu0 0.0
    %1071 = vmatpush1.msra.mxu0 0.0
    %1072 = vmatprep.subr.mxu0 0.0
    %1073 = vmatpush1.msra.mxu0 0.0
    %1074 = vmatprep.subr.mxu0 0.0
    %1075 = vmatpush1.msra.mxu0 0.0
    %1076 = vmatprep.subr.mxu0 0.0
    %1077 = vmatpush1.msra.mxu0 0.0
    %1078 = vmatprep.subr.mxu0 0.0
    %1079 = vmatpush1.msra.mxu0 0.0
    %1080 = vmatprep.subr.mxu0 0.0
    %1081 = vmatpush1.msra.mxu0 0.0
    %1082 = vmatprep.subr.mxu0 0.0
    %1083 = vmatpush1.msra.mxu0 0.0
    %1084 = vmatprep.subr.mxu0 0.0
    %1085 = vmatpush1.msra.mxu0 0.0
    %1086 = vmatprep.subr.mxu0 0.0
    %1087 = vmatpush1.msra.mxu0 0.0
    %1088 = vmatprep.subr.mxu0 0.0
    %1089 = vmatpush1.msra.mxu0 0.0
    %1090 = vmatprep.subr.mxu0 0.0
    %1091 = vmatpush1.msra.mxu0 0.0
    %1092 = vmatprep.subr.mxu0 0.0
    %1093 = vmatpush1.msra.mxu0 0.0
    %1094 = vmatprep.subr.mxu0 0.0
    %1095 = vmatpush1.msra.mxu0 0.0
    %1096 = vmatprep.subr.mxu0 0.0
    %1097 = vmatpush1.msra.mxu0 0.0
    %1098 = vmatprep.mubr.f32.mxu0 0.0
    %v1099 = vand.u32 %v386, 4294901760
    %1100 = vmatmul.mubr.f32.gmra.mrb[0].mxu0 %v1099
    %v1101 = vpop.f32.mrb[0].mxu0
    %v1102 = vadd.f32 %v1005, %v1101
    %v1103 = vpop.f32.mrb[0].mxu0
    %v1104 = vadd.f32 %v1007, %v1103
    %1105 = vmatprep.mubr.f32.mxu0 0.0
    %v1106 = vand.u32 %v389, 4294901760
    %1107 = vmatmul.mubr.f32.gmra.mrb[0].mxu0 %v1106
    %v1108 = vpop.f32.mrb[0].mxu0
    %v1109 = vadd.f32 %v1012, %v1108
    %v1110 = vpop.f32.mrb[0].mxu0
    %v1111 = vadd.f32 %v1014, %v1110
    %1112 = vdwg.mxu0
    %v1113 = vand.u32 %v339, 4294901760
    %1114 = vmatprep.subr.mxu0 %v1113
    %v1115 = vand.u32 %v338, 4294901760
    %1116 = vmatpush1.msra.mxu0 %v1115
    %v1117 = vand.u32 %v343, 4294901760
    %1118 = vmatprep.subr.mxu0 %v1117
    %v1119 = vand.u32 %v342, 4294901760
    %1120 = vmatpush1.msra.mxu0 %v1119
    %v1121 = vand.u32 %v347, 4294901760
    %1122 = vmatprep.subr.mxu0 %v1121
    %v1123 = vand.u32 %v346, 4294901760
    %1124 = vmatpush1.msra.mxu0 %v1123
    %v1125 = vand.u32 %v351, 4294901760
    %1126 = vmatprep.subr.mxu0 %v1125
    %v1127 = vand.u32 %v350, 4294901760
    %1128 = vmatpush1.msra.mxu0 %v1127
    %v1129 = vand.u32 %v355, 4294901760
    %1130 = vmatprep.subr.mxu0 %v1129
    %v1131 = vand.u32 %v354, 4294901760
    %1132 = vmatpush1.msra.mxu0 %v1131
    %v1133 = vand.u32 %v359, 4294901760
    %1134 = vmatprep.subr.mxu0 %v1133
    %v1135 = vand.u32 %v358, 4294901760
    %1136 = vmatpush1.msra.mxu0 %v1135
    %v1137 = vand.u32 %v363, 4294901760
    %1138 = vmatprep.subr.mxu0 %v1137
    %v1139 = vand.u32 %v362, 4294901760
    %1140 = vmatpush1.msra.mxu0 %v1139
    %v1141 = vand.u32 %v367, 4294901760
    %1142 = vmatprep.subr.mxu0 %v1141
    %v1143 = vand.u32 %v366, 4294901760
    %1144 = vmatpush1.msra.mxu0 %v1143
    %v1145 = vand.u32 %v371, 4294901760
    %1146 = vmatprep.subr.mxu0 %v1145
    %v1147 = vand.u32 %v370, 4294901760
    %1148 = vmatpush1.msra.mxu0 %v1147
    %1149 = vmatprep.subr.mxu0 0.0
    %1150 = vmatpush1.msra.mxu0 0.0
    %1151 = vmatprep.subr.mxu0 0.0
    %1152 = vmatpush1.msra.mxu0 0.0
    %1153 = vmatprep.subr.mxu0 0.0
    %1154 = vmatpush1.msra.mxu0 0.0
    %1155 = vmatprep.subr.mxu0 0.0
    %1156 = vmatpush1.msra.mxu0 0.0
    %1157 = vmatprep.subr.mxu0 0.0
    %1158 = vmatpush1.msra.mxu0 0.0
    %1159 = vmatprep.subr.mxu0 0.0
    %1160 = vmatpush1.msra.mxu0 0.0
    %1161 = vmatprep.subr.mxu0 0.0
    %1162 = vmatpush1.msra.mxu0 0.0
    %1163 = vmatprep.subr.mxu0 0.0
    %1164 = vmatpush1.msra.mxu0 0.0
    %1165 = vmatprep.subr.mxu0 0.0
    %1166 = vmatpush1.msra.mxu0 0.0
    %1167 = vmatprep.subr.mxu0 0.0
    %1168 = vmatpush1.msra.mxu0 0.0
    %1169 = vmatprep.subr.mxu0 0.0
    %1170 = vmatpush1.msra.mxu0 0.0
    %1171 = vmatprep.subr.mxu0 0.0
    %1172 = vmatpush1.msra.mxu0 0.0
    %1173 = vmatprep.subr.mxu0 0.0
    %1174 = vmatpush1.msra.mxu0 0.0
    %1175 = vmatprep.subr.mxu0 0.0
    %1176 = vmatpush1.msra.mxu0 0.0
    %1177 = vmatprep.subr.mxu0 0.0
    %1178 = vmatpush1.msra.mxu0 0.0
    %1179 = vmatprep.subr.mxu0 0.0
    %1180 = vmatpush1.msra.mxu0 0.0
    %1181 = vmatprep.subr.mxu0 0.0
    %1182 = vmatpush1.msra.mxu0 0.0
    %1183 = vmatprep.subr.mxu0 0.0
    %1184 = vmatpush1.msra.mxu0 0.0
    %1185 = vmatprep.subr.mxu0 0.0
    %1186 = vmatpush1.msra.mxu0 0.0
    %1187 = vmatprep.subr.mxu0 0.0
    %1188 = vmatpush1.msra.mxu0 0.0
    %1189 = vmatprep.subr.mxu0 0.0
    %1190 = vmatpush1.msra.mxu0 0.0
    %1191 = vmatprep.subr.mxu0 0.0
    %1192 = vmatpush1.msra.mxu0 0.0
    %1193 = vmatprep.subr.mxu0 0.0
    %1194 = vmatpush1.msra.mxu0 0.0
    %1195 = vmatprep.mubr.f32.mxu0 0.0
    %v1196 = vand.u32 %v386, 4294901760
    %v1197 = vsub.f32 %v386, %v1196
    %v1198 = vand.u32 %v1197, 4294901760
    %v1199 = vsub.f32 %v1197, %v1198
    %v1200 = vand.u32 %v1199, 4294901760
    %1201 = vmatmul.mubr.f32.gmra.mrb[0].mxu0 %v1200
    %v1202 = vpop.f32.mrb[0].mxu0
    %v1203 = vadd.f32 %v377, %v1202
    %v1204 = vpop.f32.mrb[0].mxu0
    %v1205 = vadd.f32 %v377, %v1204
    %1206 = vmatprep.mubr.f32.mxu0 0.0
    %v1207 = vand.u32 %v389, 4294901760
    %v1208 = vsub.f32 %v389, %v1207
    %v1209 = vand.u32 %v1208, 4294901760
    %v1210 = vsub.f32 %v1208, %v1209
    %v1211 = vand.u32 %v1210, 4294901760
    %1212 = vmatmul.mubr.f32.gmra.mrb[0].mxu0 %v1211
    %v1213 = vpop.f32.mrb[0].mxu0
    %v1214 = vadd.f32 %v382, %v1213
    %v1215 = vpop.f32.mrb[0].mxu0
    %v1216 = vadd.f32 %v382, %v1215
    %1217 = vdwg.mxu0
    %v1218 = vand.u32 %v339, 4294901760
    %v1219 = vsub.f32 %v339, %v1218
    %v1220 = vand.u32 %v1219, 4294901760
    %v1221 = vsub.f32 %v1219, %v1220
    %v1222 = vand.u32 %v1221, 4294901760
    %1223 = vmatprep.subr.mxu0 %v1222
    %v1224 = vand.u32 %v338, 4294901760
    %v1225 = vsub.f32 %v338, %v1224
    %v1226 = vand.u32 %v1225, 4294901760
    %v1227 = vsub.f32 %v1225, %v1226
    %v1228 = vand.u32 %v1227, 4294901760
    %1229 = vmatpush1.msra.mxu0 %v1228
    %v1230 = vand.u32 %v343, 4294901760
    %v1231 = vsub.f32 %v343, %v1230
    %v1232 = vand.u32 %v1231, 4294901760
    %v1233 = vsub.f32 %v1231, %v1232
    %v1234 = vand.u32 %v1233, 4294901760
    %1235 = vmatprep.subr.mxu0 %v1234
    %v1236 = vand.u32 %v342, 4294901760
    %v1237 = vsub.f32 %v342, %v1236
    %v1238 = vand.u32 %v1237, 4294901760
    %v1239 = vsub.f32 %v1237, %v1238
    %v1240 = vand.u32 %v1239, 4294901760
    %1241 = vmatpush1.msra.mxu0 %v1240
    %v1242 = vand.u32 %v347, 4294901760
    %v1243 = vsub.f32 %v347, %v1242
    %v1244 = vand.u32 %v1243, 4294901760
    %v1245 = vsub.f32 %v1243, %v1244
    %v1246 = vand.u32 %v1245, 4294901760
    %1247 = vmatprep.subr.mxu0 %v1246
    %v1248 = vand.u32 %v346, 4294901760
    %v1249 = vsub.f32 %v346, %v1248
    %v1250 = vand.u32 %v1249, 4294901760
    %v1251 = vsub.f32 %v1249, %v1250
    %v1252 = vand.u32 %v1251, 4294901760
    %1253 = vmatpush1.msra.mxu0 %v1252
    %v1254 = vand.u32 %v351, 4294901760
    %v1255 = vsub.f32 %v351, %v1254
    %v1256 = vand.u32 %v1255, 4294901760
    %v1257 = vsub.f32 %v1255, %v1256
    %v1258 = vand.u32 %v1257, 4294901760
    %1259 = vmatprep.subr.mxu0 %v1258
    %v1260 = vand.u32 %v350, 4294901760
    %v1261 = vsub.f32 %v350, %v1260
    %v1262 = vand.u32 %v1261, 4294901760
    %v1263 = vsub.f32 %v1261, %v1262
    %v1264 = vand.u32 %v1263, 4294901760
    %1265 = vmatpush1.msra.mxu0 %v1264
    %v1266 = vand.u32 %v355, 4294901760
    %v1267 = vsub.f32 %v355, %v1266
    %v1268 = vand.u32 %v1267, 4294901760
    %v1269 = vsub.f32 %v1267, %v1268
    %v1270 = vand.u32 %v1269, 4294901760
    %1271 = vmatprep.subr.mxu0 %v1270
    %v1272 = vand.u32 %v354, 4294901760
    %v1273 = vsub.f32 %v354, %v1272
    %v1274 = vand.u32 %v1273, 4294901760
    %v1275 = vsub.f32 %v1273, %v1274
    %v1276 = vand.u32 %v1275, 4294901760
    %1277 = vmatpush1.msra.mxu0 %v1276
    %v1278 = vand.u32 %v359, 4294901760
    %v1279 = vsub.f32 %v359, %v1278
    %v1280 = vand.u32 %v1279, 4294901760
    %v1281 = vsub.f32 %v1279, %v1280
    %v1282 = vand.u32 %v1281, 4294901760
    %1283 = vmatprep.subr.mxu0 %v1282
    %v1284 = vand.u32 %v358, 4294901760
    %v1285 = vsub.f32 %v358, %v1284
    %v1286 = vand.u32 %v1285, 4294901760
    %v1287 = vsub.f32 %v1285, %v1286
    %v1288 = vand.u32 %v1287, 4294901760
    %1289 = vmatpush1.msra.mxu0 %v1288
    %v1290 = vand.u32 %v363, 4294901760
    %v1291 = vsub.f32 %v363, %v1290
    %v1292 = vand.u32 %v1291, 4294901760
    %v1293 = vsub.f32 %v1291, %v1292
    %v1294 = vand.u32 %v1293, 4294901760
    %1295 = vmatprep.subr.mxu0 %v1294
    %v1296 = vand.u32 %v362, 4294901760
    %v1297 = vsub.f32 %v362, %v1296
    %v1298 = vand.u32 %v1297, 4294901760
    %v1299 = vsub.f32 %v1297, %v1298
    %v1300 = vand.u32 %v1299, 4294901760
    %1301 = vmatpush1.msra.mxu0 %v1300
    %v1302 = vand.u32 %v367, 4294901760
    %v1303 = vsub.f32 %v367, %v1302
    %v1304 = vand.u32 %v1303, 4294901760
    %v1305 = vsub.f32 %v1303, %v1304
    %v1306 = vand.u32 %v1305, 4294901760
    %1307 = vmatprep.subr.mxu0 %v1306
    %v1308 = vand.u32 %v366, 4294901760
    %v1309 = vsub.f32 %v366, %v1308
    %v1310 = vand.u32 %v1309, 4294901760
    %v1311 = vsub.f32 %v1309, %v1310
    %v1312 = vand.u32 %v1311, 4294901760
    %1313 = vmatpush1.msra.mxu0 %v1312
    %v1314 = vand.u32 %v371, 4294901760
    %v1315 = vsub.f32 %v371, %v1314
    %v1316 = vand.u32 %v1315, 4294901760
    %v1317 = vsub.f32 %v1315, %v1316
    %v1318 = vand.u32 %v1317, 4294901760
    %1319 = vmatprep.subr.mxu0 %v1318
    %v1320 = vand.u32 %v370, 4294901760
    %v1321 = vsub.f32 %v370, %v1320
    %v1322 = vand.u32 %v1321, 4294901760
    %v1323 = vsub.f32 %v1321, %v1322
    %v1324 = vand.u32 %v1323, 4294901760
    %1325 = vmatpush1.msra.mxu0 %v1324
    %1326 = vmatprep.subr.mxu0 0.0
    %1327 = vmatpush1.msra.mxu0 0.0
    %1328 = vmatprep.subr.mxu0 0.0
    %1329 = vmatpush1.msra.mxu0 0.0
    %1330 = vmatprep.subr.mxu0 0.0
    %1331 = vmatpush1.msra.mxu0 0.0
    %1332 = vmatprep.subr.mxu0 0.0
    %1333 = vmatpush1.msra.mxu0 0.0
    %1334 = vmatprep.subr.mxu0 0.0
    %1335 = vmatpush1.msra.mxu0 0.0
    %1336 = vmatprep.subr.mxu0 0.0
    %1337 = vmatpush1.msra.mxu0 0.0
    %1338 = vmatprep.subr.mxu0 0.0
    %1339 = vmatpush1.msra.mxu0 0.0
    %1340 = vmatprep.subr.mxu0 0.0
    %1341 = vmatpush1.msra.mxu0 0.0
    %1342 = vmatprep.subr.mxu0 0.0
    %1343 = vmatpush1.msra.mxu0 0.0
    %1344 = vmatprep.subr.mxu0 0.0
    %1345 = vmatpush1.msra.mxu0 0.0
    %1346 = vmatprep.subr.mxu0 0.0
    %1347 = vmatpush1.msra.mxu0 0.0
    %1348 = vmatprep.subr.mxu0 0.0
    %1349 = vmatpush1.msra.mxu0 0.0
    %1350 = vmatprep.subr.mxu0 0.0
    %1351 = vmatpush1.msra.mxu0 0.0
    %1352 = vmatprep.subr.mxu0 0.0
    %1353 = vmatpush1.msra.mxu0 0.0
    %1354 = vmatprep.subr.mxu0 0.0
    %1355 = vmatpush1.msra.mxu0 0.0
    %1356 = vmatprep.subr.mxu0 0.0
    %1357 = vmatpush1.msra.mxu0 0.0
    %1358 = vmatprep.subr.mxu0 0.0
    %1359 = vmatpush1.msra.mxu0 0.0
    %1360 = vmatprep.subr.mxu0 0.0
    %1361 = vmatpush1.msra.mxu0 0.0
    %1362 = vmatprep.subr.mxu0 0.0
    %1363 = vmatpush1.msra.mxu0 0.0
    %1364 = vmatprep.subr.mxu0 0.0
    %1365 = vmatpush1.msra.mxu0 0.0
    %1366 = vmatprep.subr.mxu0 0.0
    %1367 = vmatpush1.msra.mxu0 0.0
    %1368 = vmatprep.subr.mxu0 0.0
    %1369 = vmatpush1.msra.mxu0 0.0
    %1370 = vmatprep.subr.mxu0 0.0
    %1371 = vmatpush1.msra.mxu0 0.0
    %1372 = vmatprep.mubr.f32.mxu0 0.0
    %v1373 = vand.u32 %v386, 4294901760
    %1374 = vmatmul.mubr.f32.gmra.mrb[0].mxu0 %v1373
    %v1375 = vpop.f32.mrb[0].mxu0
    %v1376 = vadd.f32 %v1203, %v1375
    %v1377 = vpop.f32.mrb[0].mxu0
    %v1378 = vadd.f32 %v1205, %v1377
    %1379 = vmatprep.mubr.f32.mxu0 0.0
    %v1380 = vand.u32 %v389, 4294901760
    %1381 = vmatmul.mubr.f32.gmra.mrb[0].mxu0 %v1380
    %v1382 = vpop.f32.mrb[0].mxu0
    %v1383 = vadd.f32 %v1214, %v1382
    %v1384 = vpop.f32.mrb[0].mxu0
    %v1385 = vadd.f32 %v1216, %v1384
    %1386 = vdwg.mxu0
    %v1387 = vand.u32 %v339, 4294901760
    %v1388 = vsub.f32 %v339, %v1387
    %1389 = vmatprep.subr.mxu0 %v1388
    %v1390 = vand.u32 %v338, 4294901760
    %v1391 = vsub.f32 %v338, %v1390
    %1392 = vmatpush1.msra.mxu0 %v1391
    %v1393 = vand.u32 %v343, 4294901760
    %v1394 = vsub.f32 %v343, %v1393
    %1395 = vmatprep.subr.mxu0 %v1394
    %v1396 = vand.u32 %v342, 4294901760
    %v1397 = vsub.f32 %v342, %v1396
    %1398 = vmatpush1.msra.mxu0 %v1397
    %v1399 = vand.u32 %v347, 4294901760
    %v1400 = vsub.f32 %v347, %v1399
    %1401 = vmatprep.subr.mxu0 %v1400
    %v1402 = vand.u32 %v346, 4294901760
    %v1403 = vsub.f32 %v346, %v1402
    %1404 = vmatpush1.msra.mxu0 %v1403
    %v1405 = vand.u32 %v351, 4294901760
    %v1406 = vsub.f32 %v351, %v1405
    %1407 = vmatprep.subr.mxu0 %v1406
    %v1408 = vand.u32 %v350, 4294901760
    %v1409 = vsub.f32 %v350, %v1408
    %1410 = vmatpush1.msra.mxu0 %v1409
    %v1411 = vand.u32 %v355, 4294901760
    %v1412 = vsub.f32 %v355, %v1411
    %1413 = vmatprep.subr.mxu0 %v1412
    %v1414 = vand.u32 %v354, 4294901760
    %v1415 = vsub.f32 %v354, %v1414
    %1416 = vmatpush1.msra.mxu0 %v1415
    %v1417 = vand.u32 %v359, 4294901760
    %v1418 = vsub.f32 %v359, %v1417
    %1419 = vmatprep.subr.mxu0 %v1418
    %v1420 = vand.u32 %v358, 4294901760
    %v1421 = vsub.f32 %v358, %v1420
    %1422 = vmatpush1.msra.mxu0 %v1421
    %v1423 = vand.u32 %v363, 4294901760
    %v1424 = vsub.f32 %v363, %v1423
    %1425 = vmatprep.subr.mxu0 %v1424
    %v1426 = vand.u32 %v362, 4294901760
    %v1427 = vsub.f32 %v362, %v1426
    %1428 = vmatpush1.msra.mxu0 %v1427
    %v1429 = vand.u32 %v367, 4294901760
    %v1430 = vsub.f32 %v367, %v1429
    %1431 = vmatprep.subr.mxu0 %v1430
    %v1432 = vand.u32 %v366, 4294901760
    %v1433 = vsub.f32 %v366, %v1432
    %1434 = vmatpush1.msra.mxu0 %v1433
    %v1435 = vand.u32 %v371, 4294901760
    %v1436 = vsub.f32 %v371, %v1435
    %1437 = vmatprep.subr.mxu0 %v1436
    %v1438 = vand.u32 %v370, 4294901760
    %v1439 = vsub.f32 %v370, %v1438
    %1440 = vmatpush1.msra.mxu0 %v1439
    %1441 = vmatprep.subr.mxu0 0.0
    %1442 = vmatpush1.msra.mxu0 0.0
    %1443 = vmatprep.subr.mxu0 0.0
    %1444 = vmatpush1.msra.mxu0 0.0
    %1445 = vmatprep.subr.mxu0 0.0
    %1446 = vmatpush1.msra.mxu0 0.0
    %1447 = vmatprep.subr.mxu0 0.0
    %1448 = vmatpush1.msra.mxu0 0.0
    %1449 = vmatprep.subr.mxu0 0.0
    %1450 = vmatpush1.msra.mxu0 0.0
    %1451 = vmatprep.subr.mxu0 0.0
    %1452 = vmatpush1.msra.mxu0 0.0
    %1453 = vmatprep.subr.mxu0 0.0
    %1454 = vmatpush1.msra.mxu0 0.0
    %1455 = vmatprep.subr.mxu0 0.0
    %1456 = vmatpush1.msra.mxu0 0.0
    %1457 = vmatprep.subr.mxu0 0.0
    %1458 = vmatpush1.msra.mxu0 0.0
    %1459 = vmatprep.subr.mxu0 0.0
    %1460 = vmatpush1.msra.mxu0 0.0
    %1461 = vmatprep.subr.mxu0 0.0
    %1462 = vmatpush1.msra.mxu0 0.0
    %1463 = vmatprep.subr.mxu0 0.0
    %1464 = vmatpush1.msra.mxu0 0.0
    %1465 = vmatprep.subr.mxu0 0.0
    %1466 = vmatpush1.msra.mxu0 0.0
    %1467 = vmatprep.subr.mxu0 0.0
    %1468 = vmatpush1.msra.mxu0 0.0
    %1469 = vmatprep.subr.mxu0 0.0
    %1470 = vmatpush1.msra.mxu0 0.0
    %1471 = vmatprep.subr.mxu0 0.0
    %1472 = vmatpush1.msra.mxu0 0.0
    %1473 = vmatprep.subr.mxu0 0.0
    %1474 = vmatpush1.msra.mxu0 0.0
    %1475 = vmatprep.subr.mxu0 0.0
    %1476 = vmatpush1.msra.mxu0 0.0
    %1477 = vmatprep.subr.mxu0 0.0
    %1478 = vmatpush1.msra.mxu0 0.0
    %1479 = vmatprep.subr.mxu0 0.0
    %1480 = vmatpush1.msra.mxu0 0.0
    %1481 = vmatprep.subr.mxu0 0.0
    %1482 = vmatpush1.msra.mxu0 0.0
    %1483 = vmatprep.subr.mxu0 0.0
    %1484 = vmatpush1.msra.mxu0 0.0
    %1485 = vmatprep.subr.mxu0 0.0
    %1486 = vmatpush1.msra.mxu0 0.0
    %1487 = vmatprep.mubr.f32.mxu0 0.0
    %v1488 = vand.u32 %v386, 4294901760
    %v1489 = vsub.f32 %v386, %v1488
    %1490 = vmatmul.mubr.f32.gmra.mrb[0].mxu0 %v1489
    %v1491 = vpop.f32.mrb[0].mxu0
    %v1492 = vadd.f32 %v1376, %v1491
    %v1493 = vpop.f32.mrb[0].mxu0
    %v1494 = vadd.f32 %v1378, %v1493
    %1495 = vmatprep.mubr.f32.mxu0 0.0
    %v1496 = vand.u32 %v389, 4294901760
    %v1497 = vsub.f32 %v389, %v1496
    %1498 = vmatmul.mubr.f32.gmra.mrb[0].mxu0 %v1497
    %v1499 = vpop.f32.mrb[0].mxu0
    %v1500 = vadd.f32 %v1383, %v1499
    %v1501 = vpop.f32.mrb[0].mxu0
    %v1502 = vadd.f32 %v1385, %v1501
    %1503 = vdwg.mxu0
    %v1504 = vand.u32 %v339, 4294901760
    %1505 = vmatprep.subr.mxu0 %v1504
    %v1506 = vand.u32 %v338, 4294901760
    %1507 = vmatpush1.msra.mxu0 %v1506
    %v1508 = vand.u32 %v343, 4294901760
    %1509 = vmatprep.subr.mxu0 %v1508
    %v1510 = vand.u32 %v342, 4294901760
    %1511 = vmatpush1.msra.mxu0 %v1510
    %v1512 = vand.u32 %v347, 4294901760
    %1513 = vmatprep.subr.mxu0 %v1512
    %v1514 = vand.u32 %v346, 4294901760
    %1515 = vmatpush1.msra.mxu0 %v1514
    %v1516 = vand.u32 %v351, 4294901760
    %1517 = vmatprep.subr.mxu0 %v1516
    %v1518 = vand.u32 %v350, 4294901760
    %1519 = vmatpush1.msra.mxu0 %v1518
    %v1520 = vand.u32 %v355, 4294901760
    %1521 = vmatprep.subr.mxu0 %v1520
    %v1522 = vand.u32 %v354, 4294901760
    %1523 = vmatpush1.msra.mxu0 %v1522
    %v1524 = vand.u32 %v359, 4294901760
    %1525 = vmatprep.subr.mxu0 %v1524
    %v1526 = vand.u32 %v358, 4294901760
    %1527 = vmatpush1.msra.mxu0 %v1526
    %v1528 = vand.u32 %v363, 4294901760
    %1529 = vmatprep.subr.mxu0 %v1528
    %v1530 = vand.u32 %v362, 4294901760
    %1531 = vmatpush1.msra.mxu0 %v1530
    %v1532 = vand.u32 %v367, 4294901760
    %1533 = vmatprep.subr.mxu0 %v1532
    %v1534 = vand.u32 %v366, 4294901760
    %1535 = vmatpush1.msra.mxu0 %v1534
    %v1536 = vand.u32 %v371, 4294901760
    %1537 = vmatprep.subr.mxu0 %v1536
    %v1538 = vand.u32 %v370, 4294901760
    %1539 = vmatpush1.msra.mxu0 %v1538
    %1540 = vmatprep.subr.mxu0 0.0
    %1541 = vmatpush1.msra.mxu0 0.0
    %1542 = vmatprep.subr.mxu0 0.0
    %1543 = vmatpush1.msra.mxu0 0.0
    %1544 = vmatprep.subr.mxu0 0.0
    %1545 = vmatpush1.msra.mxu0 0.0
    %1546 = vmatprep.subr.mxu0 0.0
    %1547 = vmatpush1.msra.mxu0 0.0
    %1548 = vmatprep.subr.mxu0 0.0
    %1549 = vmatpush1.msra.mxu0 0.0
    %1550 = vmatprep.subr.mxu0 0.0
    %1551 = vmatpush1.msra.mxu0 0.0
    %1552 = vmatprep.subr.mxu0 0.0
    %1553 = vmatpush1.msra.mxu0 0.0
    %1554 = vmatprep.subr.mxu0 0.0
    %1555 = vmatpush1.msra.mxu0 0.0
    %1556 = vmatprep.subr.mxu0 0.0
    %1557 = vmatpush1.msra.mxu0 0.0
    %1558 = vmatprep.subr.mxu0 0.0
    %1559 = vmatpush1.msra.mxu0 0.0
    %1560 = vmatprep.subr.mxu0 0.0
    %1561 = vmatpush1.msra.mxu0 0.0
    %1562 = vmatprep.subr.mxu0 0.0
    %1563 = vmatpush1.msra.mxu0 0.0
    %1564 = vmatprep.subr.mxu0 0.0
    %1565 = vmatpush1.msra.mxu0 0.0
    %1566 = vmatprep.subr.mxu0 0.0
    %1567 = vmatpush1.msra.mxu0 0.0
    %1568 = vmatprep.subr.mxu0 0.0
    %1569 = vmatpush1.msra.mxu0 0.0
    %1570 = vmatprep.subr.mxu0 0.0
    %1571 = vmatpush1.msra.mxu0 0.0
    %1572 = vmatprep.subr.mxu0 0.0
    %1573 = vmatpush1.msra.mxu0 0.0
    %1574 = vmatprep.subr.mxu0 0.0
    %1575 = vmatpush1.msra.mxu0 0.0
    %1576 = vmatprep.subr.mxu0 0.0
    %1577 = vmatpush1.msra.mxu0 0.0
    %1578 = vmatprep.subr.mxu0 0.0
    %1579 = vmatpush1.msra.mxu0 0.0
    %1580 = vmatprep.subr.mxu0 0.0
    %1581 = vmatpush1.msra.mxu0 0.0
    %1582 = vmatprep.subr.mxu0 0.0
    %1583 = vmatpush1.msra.mxu0 0.0
    %1584 = vmatprep.subr.mxu0 0.0
    %1585 = vmatpush1.msra.mxu0 0.0
    %1586 = vmatprep.mubr.f32.mxu0 0.0
    %v1587 = vand.u32 %v386, 4294901760
    %v1588 = vsub.f32 %v386, %v1587
    %v1589 = vand.u32 %v1588, 4294901760
    %1590 = vmatmul.mubr.f32.gmra.mrb[0].mxu0 %v1589
    %v1591 = vpop.f32.mrb[0].mxu0
    %v1592 = vadd.f32 %v1492, %v1591
    %v1593 = vpop.f32.mrb[0].mxu0
    %v1594 = vadd.f32 %v1494, %v1593
    %1595 = vmatprep.mubr.f32.mxu0 0.0
    %v1596 = vand.u32 %v389, 4294901760
    %v1597 = vsub.f32 %v389, %v1596
    %v1598 = vand.u32 %v1597, 4294901760
    %1599 = vmatmul.mubr.f32.gmra.mrb[0].mxu0 %v1598
    %v1600 = vpop.f32.mrb[0].mxu0
    %v1601 = vadd.f32 %v1500, %v1600
    %v1602 = vpop.f32.mrb[0].mxu0
    %v1603 = vadd.f32 %v1502, %v1602
    %1604 = vdwg.mxu0
    %v1605 = vand.u32 %v339, 4294901760
    %v1606 = vsub.f32 %v339, %v1605
    %v1607 = vand.u32 %v1606, 4294901760
    %1608 = vmatprep.subr.mxu0 %v1607
    %v1609 = vand.u32 %v338, 4294901760
    %v1610 = vsub.f32 %v338, %v1609
    %v1611 = vand.u32 %v1610, 4294901760
    %1612 = vmatpush1.msra.mxu0 %v1611
    %v1613 = vand.u32 %v343, 4294901760
    %v1614 = vsub.f32 %v343, %v1613
    %v1615 = vand.u32 %v1614, 4294901760
    %1616 = vmatprep.subr.mxu0 %v1615
    %v1617 = vand.u32 %v342, 4294901760
    %v1618 = vsub.f32 %v342, %v1617
    %v1619 = vand.u32 %v1618, 4294901760
    %1620 = vmatpush1.msra.mxu0 %v1619
    %v1621 = vand.u32 %v347, 4294901760
    %v1622 = vsub.f32 %v347, %v1621
    %v1623 = vand.u32 %v1622, 4294901760
    %1624 = vmatprep.subr.mxu0 %v1623
    %v1625 = vand.u32 %v346, 4294901760
    %v1626 = vsub.f32 %v346, %v1625
    %v1627 = vand.u32 %v1626, 4294901760
    %1628 = vmatpush1.msra.mxu0 %v1627
    %v1629 = vand.u32 %v351, 4294901760
    %v1630 = vsub.f32 %v351, %v1629
    %v1631 = vand.u32 %v1630, 4294901760
    %1632 = vmatprep.subr.mxu0 %v1631
    %v1633 = vand.u32 %v350, 4294901760
    %v1634 = vsub.f32 %v350, %v1633
    %v1635 = vand.u32 %v1634, 4294901760
    %1636 = vmatpush1.msra.mxu0 %v1635
    %v1637 = vand.u32 %v355, 4294901760
    %v1638 = vsub.f32 %v355, %v1637
    %v1639 = vand.u32 %v1638, 4294901760
    %1640 = vmatprep.subr.mxu0 %v1639
    %v1641 = vand.u32 %v354, 4294901760
    %v1642 = vsub.f32 %v354, %v1641
    %v1643 = vand.u32 %v1642, 4294901760
    %1644 = vmatpush1.msra.mxu0 %v1643
    %v1645 = vand.u32 %v359, 4294901760
    %v1646 = vsub.f32 %v359, %v1645
    %v1647 = vand.u32 %v1646, 4294901760
    %1648 = vmatprep.subr.mxu0 %v1647
    %v1649 = vand.u32 %v358, 4294901760
    %v1650 = vsub.f32 %v358, %v1649
    %v1651 = vand.u32 %v1650, 4294901760
    %1652 = vmatpush1.msra.mxu0 %v1651
    %v1653 = vand.u32 %v363, 4294901760
    %v1654 = vsub.f32 %v363, %v1653
    %v1655 = vand.u32 %v1654, 4294901760
    %1656 = vmatprep.subr.mxu0 %v1655
    %v1657 = vand.u32 %v362, 4294901760
    %v1658 = vsub.f32 %v362, %v1657
    %v1659 = vand.u32 %v1658, 4294901760
    %1660 = vmatpush1.msra.mxu0 %v1659
    %v1661 = vand.u32 %v367, 4294901760
    %v1662 = vsub.f32 %v367, %v1661
    %v1663 = vand.u32 %v1662, 4294901760
    %1664 = vmatprep.subr.mxu0 %v1663
    %v1665 = vand.u32 %v366, 4294901760
    %v1666 = vsub.f32 %v366, %v1665
    %v1667 = vand.u32 %v1666, 4294901760
    %1668 = vmatpush1.msra.mxu0 %v1667
    %v1669 = vand.u32 %v371, 4294901760
    %v1670 = vsub.f32 %v371, %v1669
    %v1671 = vand.u32 %v1670, 4294901760
    %1672 = vmatprep.subr.mxu0 %v1671
    %v1673 = vand.u32 %v370, 4294901760
    %v1674 = vsub.f32 %v370, %v1673
    %v1675 = vand.u32 %v1674, 4294901760
    %1676 = vmatpush1.msra.mxu0 %v1675
    %1677 = vmatprep.subr.mxu0 0.0
    %1678 = vmatpush1.msra.mxu0 0.0
    %1679 = vmatprep.subr.mxu0 0.0
    %1680 = vmatpush1.msra.mxu0 0.0
    %1681 = vmatprep.subr.mxu0 0.0
    %1682 = vmatpush1.msra.mxu0 0.0
    %1683 = vmatprep.subr.mxu0 0.0
    %1684 = vmatpush1.msra.mxu0 0.0
    %1685 = vmatprep.subr.mxu0 0.0
    %1686 = vmatpush1.msra.mxu0 0.0
    %1687 = vmatprep.subr.mxu0 0.0
    %1688 = vmatpush1.msra.mxu0 0.0
    %1689 = vmatprep.subr.mxu0 0.0
    %1690 = vmatpush1.msra.mxu0 0.0
    %1691 = vmatprep.subr.mxu0 0.0
    %1692 = vmatpush1.msra.mxu0 0.0
    %1693 = vmatprep.subr.mxu0 0.0
    %1694 = vmatpush1.msra.mxu0 0.0
    %1695 = vmatprep.subr.mxu0 0.0
    %1696 = vmatpush1.msra.mxu0 0.0
    %1697 = vmatprep.subr.mxu0 0.0
    %1698 = vmatpush1.msra.mxu0 0.0
    %1699 = vmatprep.subr.mxu0 0.0
    %1700 = vmatpush1.msra.mxu0 0.0
    %1701 = vmatprep.subr.mxu0 0.0
    %1702 = vmatpush1.msra.mxu0 0.0
    %1703 = vmatprep.subr.mxu0 0.0
    %1704 = vmatpush1.msra.mxu0 0.0
    %1705 = vmatprep.subr.mxu0 0.0
    %1706 = vmatpush1.msra.mxu0 0.0
    %1707 = vmatprep.subr.mxu0 0.0
    %1708 = vmatpush1.msra.mxu0 0.0
    %1709 = vmatprep.subr.mxu0 0.0
    %1710 = vmatpush1.msra.mxu0 0.0
    %1711 = vmatprep.subr.mxu0 0.0
    %1712 = vmatpush1.msra.mxu0 0.0
    %1713 = vmatprep.subr.mxu0 0.0
    %1714 = vmatpush1.msra.mxu0 0.0
    %1715 = vmatprep.subr.mxu0 0.0
    %1716 = vmatpush1.msra.mxu0 0.0
    %1717 = vmatprep.subr.mxu0 0.0
    %1718 = vmatpush1.msra.mxu0 0.0
    %1719 = vmatprep.subr.mxu0 0.0
    %1720 = vmatpush1.msra.mxu0 0.0
    %1721 = vmatprep.subr.mxu0 0.0
    %1722 = vmatpush1.msra.mxu0 0.0
    %1723 = vmatprep.mubr.f32.mxu0 0.0
    %v1724 = vand.u32 %v386, 4294901760
    %1725 = vmatmul.mubr.f32.gmra.mrb[0].mxu0 %v1724
    %v1726 = vpop.f32.mrb[0].mxu0
    %v1727 = vadd.f32 %v1592, %v1726
    %v1728 = vpop.f32.mrb[0].mxu0
    %v1729 = vadd.f32 %v1594, %v1728
    %1730 = vmatprep.mubr.f32.mxu0 0.0
    %v1731 = vand.u32 %v389, 4294901760
    %1732 = vmatmul.mubr.f32.gmra.mrb[0].mxu0 %v1731
    %v1733 = vpop.f32.mrb[0].mxu0
    %v1734 = vadd.f32 %v1601, %v1733
    %v1735 = vpop.f32.mrb[0].mxu0
    %v1736 = vadd.f32 %v1603, %v1735
    %1737 = vdwg.mxu0
    %v1738 = vand.u32 %v339, 4294901760
    %1739 = vmatprep.subr.mxu0 %v1738
    %v1740 = vand.u32 %v338, 4294901760
    %1741 = vmatpush1.msra.mxu0 %v1740
    %v1742 = vand.u32 %v343, 4294901760
    %1743 = vmatprep.subr.mxu0 %v1742
    %v1744 = vand.u32 %v342, 4294901760
    %1745 = vmatpush1.msra.mxu0 %v1744
    %v1746 = vand.u32 %v347, 4294901760
    %1747 = vmatprep.subr.mxu0 %v1746
    %v1748 = vand.u32 %v346, 4294901760
    %1749 = vmatpush1.msra.mxu0 %v1748
    %v1750 = vand.u32 %v351, 4294901760
    %1751 = vmatprep.subr.mxu0 %v1750
    %v1752 = vand.u32 %v350, 4294901760
    %1753 = vmatpush1.msra.mxu0 %v1752
    %v1754 = vand.u32 %v355, 4294901760
    %1755 = vmatprep.subr.mxu0 %v1754
    %v1756 = vand.u32 %v354, 4294901760
    %1757 = vmatpush1.msra.mxu0 %v1756
    %v1758 = vand.u32 %v359, 4294901760
    %1759 = vmatprep.subr.mxu0 %v1758
    %v1760 = vand.u32 %v358, 4294901760
    %1761 = vmatpush1.msra.mxu0 %v1760
    %v1762 = vand.u32 %v363, 4294901760
    %1763 = vmatprep.subr.mxu0 %v1762
    %v1764 = vand.u32 %v362, 4294901760
    %1765 = vmatpush1.msra.mxu0 %v1764
    %v1766 = vand.u32 %v367, 4294901760
    %1767 = vmatprep.subr.mxu0 %v1766
    %v1768 = vand.u32 %v366, 4294901760
    %1769 = vmatpush1.msra.mxu0 %v1768
    %v1770 = vand.u32 %v371, 4294901760
    %1771 = vmatprep.subr.mxu0 %v1770
    %v1772 = vand.u32 %v370, 4294901760
    %1773 = vmatpush1.msra.mxu0 %v1772
    %1774 = vmatprep.subr.mxu0 0.0
    %1775 = vmatpush1.msra.mxu0 0.0
    %1776 = vmatprep.subr.mxu0 0.0
    %1777 = vmatpush1.msra.mxu0 0.0
    %1778 = vmatprep.subr.mxu0 0.0
    %1779 = vmatpush1.msra.mxu0 0.0
    %1780 = vmatprep.subr.mxu0 0.0
    %1781 = vmatpush1.msra.mxu0 0.0
    %1782 = vmatprep.subr.mxu0 0.0
    %1783 = vmatpush1.msra.mxu0 0.0
    %1784 = vmatprep.subr.mxu0 0.0
    %1785 = vmatpush1.msra.mxu0 0.0
    %1786 = vmatprep.subr.mxu0 0.0
    %1787 = vmatpush1.msra.mxu0 0.0
    %1788 = vmatprep.subr.mxu0 0.0
    %1789 = vmatpush1.msra.mxu0 0.0
    %1790 = vmatprep.subr.mxu0 0.0
    %1791 = vmatpush1.msra.mxu0 0.0
    %1792 = vmatprep.subr.mxu0 0.0
    %1793 = vmatpush1.msra.mxu0 0.0
    %1794 = vmatprep.subr.mxu0 0.0
    %1795 = vmatpush1.msra.mxu0 0.0
    %1796 = vmatprep.subr.mxu0 0.0
    %1797 = vmatpush1.msra.mxu0 0.0
    %1798 = vmatprep.subr.mxu0 0.0
    %1799 = vmatpush1.msra.mxu0 0.0
    %1800 = vmatprep.subr.mxu0 0.0
    %1801 = vmatpush1.msra.mxu0 0.0
    %1802 = vmatprep.subr.mxu0 0.0
    %1803 = vmatpush1.msra.mxu0 0.0
    %1804 = vmatprep.subr.mxu0 0.0
    %1805 = vmatpush1.msra.mxu0 0.0
    %1806 = vmatprep.subr.mxu0 0.0
    %1807 = vmatpush1.msra.mxu0 0.0
    %1808 = vmatprep.subr.mxu0 0.0
    %1809 = vmatpush1.msra.mxu0 0.0
    %1810 = vmatprep.subr.mxu0 0.0
    %1811 = vmatpush1.msra.mxu0 0.0
    %1812 = vmatprep.subr.mxu0 0.0
    %1813 = vmatpush1.msra.mxu0 0.0
    %1814 = vmatprep.subr.mxu0 0.0
    %1815 = vmatpush1.msra.mxu0 0.0
    %1816 = vmatprep.subr.mxu0 0.0
    %1817 = vmatpush1.msra.mxu0 0.0
    %1818 = vmatprep.subr.mxu0 0.0
    %1819 = vmatpush1.msra.mxu0 0.0
    %1820 = vmatprep.mubr.f32.mxu0 0.0
    %v1821 = vand.u32 %v386, 4294901760
    %1822 = vmatmul.mubr.f32.gmra.mrb[0].mxu0 %v1821
    %v1823 = vpop.f32.mrb[0].mxu0
    %v1824 = vadd.f32 %v1727, %v1823
    %v1825 = vpop.f32.mrb[0].mxu0
    %v1826 = vadd.f32 %v1729, %v1825
    %1827 = vmatprep.mubr.f32.mxu0 0.0
    %v1828 = vand.u32 %v389, 4294901760
    %1829 = vmatmul.mubr.f32.gmra.mrb[0].mxu0 %v1828
    %v1830 = vpop.f32.mrb[0].mxu0
    %v1831 = vadd.f32 %v1734, %v1830
    %v1832 = vpop.f32.mrb[0].mxu0
    %v1833 = vadd.f32 %v1736, %v1832
    %1834 = vdwg.mxu0
    %v1835 = vmax.f32 %v1102, 0.0
    %v1836 = vmax.f32 %v1104, 0.0
    %v1837 = vmax.f32 %v1824, 0.0
    %v1838 = vmax.f32 %v1826, 0.0
    %v1839 = vmax.f32 %v1109, 0.0
    %v1840 = vmax.f32 %v1111, 0.0
    %v1841 = vmax.f32 %v1831, 0.0
    %v1842 = vmax.f32 %v1833, 0.0
    %v1843 = vadd.f32 %v1102, 3.0
    %v1844 = vadd.f32 %v1104, 3.0
    %v1845 = vadd.f32 %v1824, 3.0
    %v1846 = vadd.f32 %v1826, 3.0
    %v1847 = vadd.f32 %v1109, 3.0
    %v1848 = vadd.f32 %v1111, 3.0
    %v1849 = vadd.f32 %v1831, 3.0
    %v1850 = vadd.f32 %v1833, 3.0
    %v1851 = vmin.f32 %v1843, 6.0
    %v1852 = vmin.f32 %v1844, 6.0
    %v1853 = vmin.f32 %v1845, 6.0
    %v1854 = vmin.f32 %v1846, 6.0
    %v1855 = vmin.f32 %v1847, 6.0
    %v1856 = vmin.f32 %v1848, 6.0
    %v1857 = vmin.f32 %v1849, 6.0
    %v1858 = vmin.f32 %v1850, 6.0
    %v1859 = vmul.f32 %v1835, %v1851
    %v1860 = vmul.f32 %v1836, %v1852
    %v1861 = vmul.f32 %v1837, %v1853
    %v1862 = vmul.f32 %v1838, %v1854
    %v1863 = vmul.f32 %v1839, %v1855
    %v1864 = vmul.f32 %v1840, %v1856
    %v1865 = vmul.f32 %v1841, %v1857
    %v1866 = vmul.f32 %v1842, %v1858
    %v1867 = vmul.f32 %v1859, 0.16666667
    %v1868 = vmul.f32 %v1860, 0.16666667
    %v1869 = vmul.f32 %v1861, 0.16666667
    %v1870 = vmul.f32 %v1862, 0.16666667
    %v1871 = vmul.f32 %v1863, 0.16666667
    %v1872 = vmul.f32 %v1864, 0.16666667
    %v1873 = vmul.f32 %v1865, 0.16666667
    %v1874 = vmul.f32 %v1866, 0.16666667
    %1875 = vst [vmem:[#allocation6] sm:$0xff] %v1867
    %1876 = vst [vmem:[#allocation6 + $0x8] sm:$0xff] %v1868
    %1877 = vst [vmem:[#allocation6 + $0x10] sm:$0xff] %v1871
    %1878 = vst [vmem:[#allocation6 + $0x18] sm:$0xff] %v1872
    %s1879 = scalar_lea.vmem [#allocation6], 32
    %1880 = vst [vmem:[%s1879] sm:$0xff] %v1869
    %1881 = vst [vmem:[%s1879 + $0x8] sm:$0xff] %v1870
    %1882 = vst [vmem:[%s1879 + $0x10] sm:$0xff] %v1873
    %1883 = vst [vmem:[%s1879 + $0x18] sm:$0xff] %v1874
    // Predicated region
    $region18: #{tpu_custom_call.1} parent=1 // pred_check
      _
    $region19: #{tpu_custom_call.1} parent=1 // pred_check_branch
      %1885 = sbr.rel (0) target = $region21
    $region20: #{tpu_custom_call.1} parent=1 // pred_region
      %s1887 = ssub.s32 1024, 1024
      %1888 = vsyncadd [#allocation5], %s1887
      %s1889 = sshll.u32 [#allocation6], 4
      %s1890 = int_to_ptr.vmem [resolvable:$true] %s1889
      %1895 = dma.vmem_to_hbm [thread:$0]  %s1890, 1024, %s3, [#allocation5], 256, 256, 16
    $region21: #{tpu_custom_call.1} parent=1 // pred_fallthru
      _
    // Predicated region
    $region22: #{tpu_custom_call.1} parent=1 // pred_check
      _
    $region23: #{tpu_custom_call.1} parent=1 // pred_check_branch
      %1897 = sbr.rel (0) target = $region25
    $region24: #{tpu_custom_call.1} parent=1 // pred_region
      %1898 = dma.done [#allocation5], 1024
    $region25: #{tpu_custom_call.1} parent=1 // pred_fallthru
      _
    %1899 = vsyncpa [#allocation4], 1
    %1900 = vsyncpa [#allocation5], 1

</llo_original>
